<compile_context>
chip_gen: v7x
topology: tpu7x:2x2x1
jax: 0.10.0
libtpu: 0.0.40
codegen_flags: <defaults>
</compile_context>

<pallas_src>
import functools

import jax
import jax.numpy as jnp
from jax.experimental import pallas as pl
from jax.experimental.pallas import tpu as pltpu


# ---------------------------------------------------------------------------
# Fused encoder-layer kernel (one grid step == one batch tile, default = whole batch)
# ---------------------------------------------------------------------------

def _layernorm(t, g, b, eps):
    mu = jnp.mean(t, axis=-1, keepdims=True)
    c = t - mu
    var = jnp.mean(c * c, axis=-1, keepdims=True)
    return c * jax.lax.rsqrt(var + eps) * g + b


def _encoder_layer_kernel(
    x_ref,                      # (Bt*S, D)  batch-major token rows
    wqkv_ref, bqkv_ref,         # (D, 3D), (1, 3D)
    wo_ref, bo_ref,             # (D, D),  (1, D)
    w1_ref, b1_ref,             # (D, FF), (1, FF)
    w2_ref, b2_ref,             # (FF, D), (1, D)
    g1_ref, bn1_ref,            # (1, D),  (1, D)
    g2_ref, bn2_ref,            # (1, D),  (1, D)
    o_ref,                      # (Bt*S, D)
    *, nhead, seq_len, eps, scale,
):
    rows, D = x_ref.shape
    S = seq_len
    Bt = rows // S
    dh = D // nhead

    x = x_ref[...].astype(jnp.float32)                    # (Bt*S, D)

    # --- self-attention: QKV in-projection over ALL tokens (one lane-dense matmul) ---
    qkv = jnp.dot(x, wqkv_ref[...], preferred_element_type=jnp.float32) + bqkv_ref[...]
    q = qkv[:, :D] * scale
    k = qkv[:, D:2 * D]
    v = qkv[:, 2 * D:]

    # --- head+batch batched attention ---
    # Build (Bt*H, S, dh) stacks from static 2-D slices; stacking along the new leading axis
    # just lays tiles out consecutively (no cross-lane shuffles).
    def split_heads(t):
        return jnp.stack(
            [t[b * S:(b + 1) * S, h * dh:(h + 1) * dh]
             for b in range(Bt) for h in range(nhead)],
            axis=0,
        )

    qh = split_heads(q)
    kh = split_heads(k)
    vh = split_heads(v)

    # K-transpose folded into the contraction (no explicit kh.T).
    s = jnp.einsum("bqd,bkd->bqk", qh, kh, preferred_element_type=jnp.float32)  # (Bt*H, S, S)
    m = jnp.max(s, axis=-1, keepdims=True)
    p = jnp.exp(s - m)
    denom = jnp.sum(p, axis=-1, keepdims=True)
    p = p * pl.reciprocal(denom, approx=True)              # EUP slot, ~free under MXU work
    a = jnp.einsum("bqk,bkd->bqd", p, vh, preferred_element_type=jnp.float32)   # (Bt*H, S, dh)

    # --- out-projection: per-head accumulation (no lane-dim head concat) ---
    wo = wo_ref[...]                                        # rows ordered [head0 | head1 | ...]
    proj_rows = []
    for b in range(Bt):
        acc = jnp.zeros((S, D), jnp.float32)
        for h in range(nhead):
            acc = acc + jnp.dot(a[b * nhead + h],
                                wo[h * dh:(h + 1) * dh, :],
                                preferred_element_type=jnp.float32)
        proj_rows.append(acc)
    proj = jnp.concatenate(proj_rows, axis=0) + bo_ref[...]  # (Bt*S, D), leading-axis concat

    # --- residual + LayerNorm1 (fused epilogue) ---
    x1 = _layernorm(x + proj, g1_ref[...], bn1_ref[...], eps)

    # --- feed-forward (ReLU) + residual + LayerNorm2 (fused epilogue) ---
    h1 = jnp.dot(x1, w1_ref[...], preferred_element_type=jnp.float32) + b1_ref[...]
    h1 = jnp.maximum(h1, 0.0)
    h2 = jnp.dot(h1, w2_ref[...], preferred_element_type=jnp.float32) + b2_ref[...]
    x2 = _layernorm(x1 + h2, g2_ref[...], bn2_ref[...], eps)

    o_ref[...] = x2.astype(o_ref.dtype)


# ---------------------------------------------------------------------------
# Wrapper
# ---------------------------------------------------------------------------

def transformer_encoder_layer(src, params, nhead, eps=1e-5, batch_tile=None):
    """src: (S, B, D) seq-first, like PyTorch. Returns (S, B, D)."""
    S, B, D = src.shape
    assert D % nhead == 0, "d_model must be divisible by nhead"
    FF = params["lin1_w"].shape[0]
    dh = D // nhead
    scale = 1.0 / (dh ** 0.5)

    if batch_tile is None:
        batch_tile = B                       # whole batch in one grid step (it fits in VMEM)
    assert B % batch_tile == 0
    n_tiles = B // batch_tile
    rows = batch_tile * S

    # One boundary relayout to batch-major so each grid step sees per-batch-contiguous,
    # lane-dense (rows, D) token slabs. TODO(synk): at production sizes keep activations
    # (B, S, D) end-to-end across layers and drop this HBM round trip.
    x = jnp.transpose(src, (1, 0, 2)).reshape(B * S, D)

    # Pre-transpose weights so every in-kernel matmul is x @ W (lane-dense outputs);
    # biases / LN params as (1, N) 2-D rows.
    wqkv = params["in_proj_w"].T                          # (D, 3D)
    bqkv = params["in_proj_b"].reshape(1, 3 * D)
    wo = params["out_proj_w"].T                           # (D, D), rows = concat-head dim
    bo = params["out_proj_b"].reshape(1, D)
    w1 = params["lin1_w"].T                               # (D, FF)
    b1 = params["lin1_b"].reshape(1, FF)
    w2 = params["lin2_w"].T                               # (FF, D)
    b2 = params["lin2_b"].reshape(1, D)
    g1 = params["ln1_g"].reshape(1, D)
    bn1 = params["ln1_b"].reshape(1, D)
    g2 = params["ln2_g"].reshape(1, D)
    bn2 = params["ln2_b"].reshape(1, D)

    def resident(arr):
        # Constant block index across the grid -> weight stays VMEM-resident (no re-DMA).
        nd = arr.ndim
        return pl.BlockSpec(arr.shape, lambda i, nd=nd: (0,) * nd)

    consts = (wqkv, bqkv, wo, bo, w1, b1, w2, b2, g1, bn1, g2, bn2)

    out = pl.pallas_call(
        functools.partial(_encoder_layer_kernel,
                          nhead=nhead, seq_len=S, eps=eps, scale=scale),
        out_shape=jax.ShapeDtypeStruct((B * S, D), src.dtype),
        grid=(n_tiles,),
        in_specs=[pl.BlockSpec((rows, D), lambda i: (i, 0))]
                 + [resident(a) for a in consts],
        out_specs=pl.BlockSpec((rows, D), lambda i: (i, 0)),
        compiler_params=pltpu.CompilerParams(
            # Batch-tile axis shards across TensorCores on v7x when batch_tile < B; with a
            # single tile it is a no-op. For production, raise vmem_limit_bytes here when
            # enlarging tiles / resident weights.
            dimension_semantics=("parallel",),
        ),
    )(x, *consts)

    return jnp.transpose(out.reshape(B, S, D), (1, 0, 2))   # back to (S, B, D)


# ---------------------------------------------------------------------------
# Pure-JAX reference (for correctness sanity check)
# ---------------------------------------------------------------------------

def reference_forward(src, params, nhead):
    S, B, D = src.shape
    H = nhead
    dh = D // H
    x = src.reshape(S * B, D)
    qkv = x @ params["in_proj_w"].T + params["in_proj_b"]
    q, k, v = jnp.split(qkv, 3, axis=-1)

    def to_heads(t):
        return t.reshape(S, B, H, dh).transpose(1, 2, 0, 3).reshape(B * H, S, dh)

    q, k, v = to_heads(q), to_heads(k), to_heads(v)
    s = jnp.einsum("bqd,bkd->bqk", q * (1.0 / dh ** 0.5), k)
    p = jax.nn.softmax(s, axis=-1)
    a = jnp.einsum("bqk,bkd->bqd", p, v)
    a = a.reshape(B, H, S, dh).transpose(2, 0, 1, 3).reshape(S * B, D)
    a = a @ params["out_proj_w"].T + params["out_proj_b"]

    def ln(t, g, b):
        m = t.mean(-1, keepdims=True)
        var = ((t - m) ** 2).mean(-1, keepdims=True)
        return (t - m) / jnp.sqrt(var + 1e-5) * g + b

    x1 = ln(x + a, params["ln1_g"], params["ln1_b"])
    ff = jnp.maximum(x1 @ params["lin1_w"].T + params["lin1_b"], 0.0)
    ff = ff @ params["lin2_w"].T + params["lin2_b"]
    x2 = ln(x1 + ff, params["ln2_g"], params["ln2_b"])
    return x2.reshape(S, B, D)


# ---------------------------------------------------------------------------
# Main
# ---------------------------------------------------------------------------

if __name__ == "__main__":
    S, B, D = 8, 2, 32          # seq, batch, d_model
    H = 4                       # nhead
    FF = 64                     # dim_feedforward

    key = jax.random.PRNGKey(0)
    ks = jax.random.split(key, 8)

    params = {
        "in_proj_w":  0.05 * jax.random.normal(ks[0], (3 * D, D), jnp.float32),
        "in_proj_b":  0.01 * jax.random.normal(ks[1], (3 * D,), jnp.float32),
        "out_proj_w": 0.05 * jax.random.normal(ks[2], (D, D), jnp.float32),
        "out_proj_b": jnp.zeros((D,), jnp.float32),
        "lin1_w":     0.05 * jax.random.normal(ks[3], (FF, D), jnp.float32),
        "lin1_b":     0.01 * jax.random.normal(ks[4], (FF,), jnp.float32),
        "lin2_w":     0.05 * jax.random.normal(ks[5], (D, FF), jnp.float32),
        "lin2_b":     0.01 * jax.random.normal(ks[6], (D,), jnp.float32),
        "ln1_g": jnp.ones((D,), jnp.float32),
        "ln1_b": jnp.zeros((D,), jnp.float32),
        "ln2_g": jnp.ones((D,), jnp.float32),
        "ln2_b": jnp.zeros((D,), jnp.float32),
    }

    src = jax.random.normal(ks[7], (S, B, D), jnp.float32)

    out = transformer_encoder_layer(src, params, nhead=H)
    out = jax.block_until_ready(out)

    ref = reference_forward(src, params, nhead=H)
    assert out.shape == (S, B, D)
    # Tolerance loosened slightly vs. exact-division version because the softmax denominator
    # now uses the approximate EUP reciprocal (pl.reciprocal(approx=True)).
    assert jnp.allclose(out, ref, atol=2e-3, rtol=2e-3)

    print("KERNEL_OK")
</pallas_src>

<mosaic_0001>
module attributes {stable_mosaic.version = 11 : i64} {
  func.func @_encoder_layer_kernel(%arg0: i32, %arg1: memref<16x32xf32, #tpu.memory_space<vmem>>, %arg2: memref<32x96xf32, #tpu.memory_space<vmem>>, %arg3: memref<1x96xf32, #tpu.memory_space<vmem>>, %arg4: memref<32x32xf32, #tpu.memory_space<vmem>>, %arg5: memref<1x32xf32, #tpu.memory_space<vmem>>, %arg6: memref<32x64xf32, #tpu.memory_space<vmem>>, %arg7: memref<1x64xf32, #tpu.memory_space<vmem>>, %arg8: memref<64x32xf32, #tpu.memory_space<vmem>>, %arg9: memref<1x32xf32, #tpu.memory_space<vmem>>, %arg10: memref<1x32xf32, #tpu.memory_space<vmem>>, %arg11: memref<1x32xf32, #tpu.memory_space<vmem>>, %arg12: memref<1x32xf32, #tpu.memory_space<vmem>>, %arg13: memref<1x32xf32, #tpu.memory_space<vmem>>, %arg14: memref<16x32xf32, #tpu.memory_space<vmem>>) attributes {dimension_semantics = [#tpu.dimension_semantics<parallel>], iteration_bounds = array<i64: 1>, scalar_prefetch = 0 : i64, scratch_operands = 0 : i64, tpu.core_type = #tpu.core_type<tc>, window_params = [{transform_indices = @transform_0, window_bounds = array<i64: 16, 32>}, {pipeline_mode = #tpu.pipeline_mode<synchronous>, transform_indices = @transform_1, window_bounds = array<i64: 32, 96>}, {pipeline_mode = #tpu.pipeline_mode<synchronous>, transform_indices = @transform_2, window_bounds = array<i64: 1, 96>}, {pipeline_mode = #tpu.pipeline_mode<synchronous>, transform_indices = @transform_3, window_bounds = array<i64: 32, 32>}, {pipeline_mode = #tpu.pipeline_mode<synchronous>, transform_indices = @transform_4, window_bounds = array<i64: 1, 32>}, {pipeline_mode = #tpu.pipeline_mode<synchronous>, transform_indices = @transform_5, window_bounds = array<i64: 32, 64>}, {pipeline_mode = #tpu.pipeline_mode<synchronous>, transform_indices = @transform_6, window_bounds = array<i64: 1, 64>}, {pipeline_mode = #tpu.pipeline_mode<synchronous>, transform_indices = @transform_7, window_bounds = array<i64: 64, 32>}, {pipeline_mode = #tpu.pipeline_mode<synchronous>, transform_indices = @transform_8, window_bounds = array<i64: 1, 32>}, {pipeline_mode = #tpu.pipeline_mode<synchronous>, transform_indices = @transform_9, window_bounds = array<i64: 1, 32>}, {pipeline_mode = #tpu.pipeline_mode<synchronous>, transform_indices = @transform_10, window_bounds = array<i64: 1, 32>}, {pipeline_mode = #tpu.pipeline_mode<synchronous>, transform_indices = @transform_11, window_bounds = array<i64: 1, 32>}, {pipeline_mode = #tpu.pipeline_mode<synchronous>, transform_indices = @transform_12, window_bounds = array<i64: 1, 32>}, {transform_indices = @transform_13, window_bounds = array<i64: 16, 32>}]} {
    %c0 = arith.constant 0 : index
    %c0_0 = arith.constant 0 : index
    %0 = vector.load %arg1[%c0, %c0_0] : memref<16x32xf32, #tpu.memory_space<vmem>>, vector<16x32xf32>
    %c0_1 = arith.constant 0 : index
    %c0_2 = arith.constant 0 : index
    %1 = vector.load %arg2[%c0_1, %c0_2] : memref<32x96xf32, #tpu.memory_space<vmem>>, vector<32x96xf32>
    %cst = arith.constant dense<0.000000e+00> : vector<16x96xf32>
    %2 = tpu.matmul %0, %1, %cst {dimension_numbers = #tpu.dot_dimension_numbers<[1], [0], [0], [1], [0, 0, 1, 1], [], []>} : vector<16x32xf32>, vector<32x96xf32>, vector<16x96xf32> -> vector<16x96xf32>
    %c0_3 = arith.constant 0 : index
    %c0_4 = arith.constant 0 : index
    %3 = vector.load %arg3[%c0_3, %c0_4] : memref<1x96xf32, #tpu.memory_space<vmem>>, vector<1x96xf32>
    %4 = vector.broadcast %3 : vector<1x96xf32> to vector<16x96xf32>
    %5 = arith.addf %2, %4 : vector<16x96xf32>
    %6 = vector.extract_strided_slice %5 {offsets = [0, 0], sizes = [16, 32], strides = [1, 1]} : vector<16x96xf32> to vector<16x32xf32>
    %cst_5 = arith.constant 0.353553385 : f32
    %7 = vector.broadcast %cst_5 : f32 to vector<16x32xf32>
    %8 = arith.mulf %6, %7 : vector<16x32xf32>
    %9 = vector.extract_strided_slice %5 {offsets = [0, 32], sizes = [16, 32], strides = [1, 1]} : vector<16x96xf32> to vector<16x32xf32>
    %10 = vector.extract_strided_slice %5 {offsets = [0, 64], sizes = [16, 32], strides = [1, 1]} : vector<16x96xf32> to vector<16x32xf32>
    %11 = vector.extract_strided_slice %8 {offsets = [0, 0], sizes = [8, 8], strides = [1, 1]} : vector<16x32xf32> to vector<8x8xf32>
    %12 = vector.extract_strided_slice %8 {offsets = [0, 8], sizes = [8, 8], strides = [1, 1]} : vector<16x32xf32> to vector<8x8xf32>
    %13 = vector.extract_strided_slice %8 {offsets = [0, 16], sizes = [8, 8], strides = [1, 1]} : vector<16x32xf32> to vector<8x8xf32>
    %14 = vector.extract_strided_slice %8 {offsets = [0, 24], sizes = [8, 8], strides = [1, 1]} : vector<16x32xf32> to vector<8x8xf32>
    %15 = vector.extract_strided_slice %8 {offsets = [8, 0], sizes = [8, 8], strides = [1, 1]} : vector<16x32xf32> to vector<8x8xf32>
    %16 = vector.extract_strided_slice %8 {offsets = [8, 8], sizes = [8, 8], strides = [1, 1]} : vector<16x32xf32> to vector<8x8xf32>
    %17 = vector.extract_strided_slice %8 {offsets = [8, 16], sizes = [8, 8], strides = [1, 1]} : vector<16x32xf32> to vector<8x8xf32>
    %18 = vector.extract_strided_slice %8 {offsets = [8, 24], sizes = [8, 8], strides = [1, 1]} : vector<16x32xf32> to vector<8x8xf32>
    %19 = vector.shape_cast %11 : vector<8x8xf32> to vector<1x8x8xf32>
    %20 = vector.shape_cast %12 : vector<8x8xf32> to vector<1x8x8xf32>
    %21 = vector.shape_cast %13 : vector<8x8xf32> to vector<1x8x8xf32>
    %22 = vector.shape_cast %14 : vector<8x8xf32> to vector<1x8x8xf32>
    %23 = vector.shape_cast %15 : vector<8x8xf32> to vector<1x8x8xf32>
    %24 = vector.shape_cast %16 : vector<8x8xf32> to vector<1x8x8xf32>
    %25 = vector.shape_cast %17 : vector<8x8xf32> to vector<1x8x8xf32>
    %26 = vector.shape_cast %18 : vector<8x8xf32> to vector<1x8x8xf32>
    %27 = tpu.concatenate %19, %20, %21, %22, %23, %24, %25, %26 in 0 : vector<1x8x8xf32>, vector<1x8x8xf32>, vector<1x8x8xf32>, vector<1x8x8xf32>, vector<1x8x8xf32>, vector<1x8x8xf32>, vector<1x8x8xf32>, vector<1x8x8xf32> -> vector<8x8x8xf32>
    %28 = vector.extract_strided_slice %9 {offsets = [0, 0], sizes = [8, 8], strides = [1, 1]} : vector<16x32xf32> to vector<8x8xf32>
    %29 = vector.extract_strided_slice %9 {offsets = [0, 8], sizes = [8, 8], strides = [1, 1]} : vector<16x32xf32> to vector<8x8xf32>
    %30 = vector.extract_strided_slice %9 {offsets = [0, 16], sizes = [8, 8], strides = [1, 1]} : vector<16x32xf32> to vector<8x8xf32>
    %31 = vector.extract_strided_slice %9 {offsets = [0, 24], sizes = [8, 8], strides = [1, 1]} : vector<16x32xf32> to vector<8x8xf32>
    %32 = vector.extract_strided_slice %9 {offsets = [8, 0], sizes = [8, 8], strides = [1, 1]} : vector<16x32xf32> to vector<8x8xf32>
    %33 = vector.extract_strided_slice %9 {offsets = [8, 8], sizes = [8, 8], strides = [1, 1]} : vector<16x32xf32> to vector<8x8xf32>
    %34 = vector.extract_strided_slice %9 {offsets = [8, 16], sizes = [8, 8], strides = [1, 1]} : vector<16x32xf32> to vector<8x8xf32>
    %35 = vector.extract_strided_slice %9 {offsets = [8, 24], sizes = [8, 8], strides = [1, 1]} : vector<16x32xf32> to vector<8x8xf32>
    %36 = vector.shape_cast %28 : vector<8x8xf32> to vector<1x8x8xf32>
    %37 = vector.shape_cast %29 : vector<8x8xf32> to vector<1x8x8xf32>
    %38 = vector.shape_cast %30 : vector<8x8xf32> to vector<1x8x8xf32>
    %39 = vector.shape_cast %31 : vector<8x8xf32> to vector<1x8x8xf32>
    %40 = vector.shape_cast %32 : vector<8x8xf32> to vector<1x8x8xf32>
    %41 = vector.shape_cast %33 : vector<8x8xf32> to vector<1x8x8xf32>
    %42 = vector.shape_cast %34 : vector<8x8xf32> to vector<1x8x8xf32>
    %43 = vector.shape_cast %35 : vector<8x8xf32> to vector<1x8x8xf32>
    %44 = tpu.concatenate %36, %37, %38, %39, %40, %41, %42, %43 in 0 : vector<1x8x8xf32>, vector<1x8x8xf32>, vector<1x8x8xf32>, vector<1x8x8xf32>, vector<1x8x8xf32>, vector<1x8x8xf32>, vector<1x8x8xf32>, vector<1x8x8xf32> -> vector<8x8x8xf32>
    %45 = vector.extract_strided_slice %10 {offsets = [0, 0], sizes = [8, 8], strides = [1, 1]} : vector<16x32xf32> to vector<8x8xf32>
    %46 = vector.extract_strided_slice %10 {offsets = [0, 8], sizes = [8, 8], strides = [1, 1]} : vector<16x32xf32> to vector<8x8xf32>
    %47 = vector.extract_strided_slice %10 {offsets = [0, 16], sizes = [8, 8], strides = [1, 1]} : vector<16x32xf32> to vector<8x8xf32>
    %48 = vector.extract_strided_slice %10 {offsets = [0, 24], sizes = [8, 8], strides = [1, 1]} : vector<16x32xf32> to vector<8x8xf32>
    %49 = vector.extract_strided_slice %10 {offsets = [8, 0], sizes = [8, 8], strides = [1, 1]} : vector<16x32xf32> to vector<8x8xf32>
    %50 = vector.extract_strided_slice %10 {offsets = [8, 8], sizes = [8, 8], strides = [1, 1]} : vector<16x32xf32> to vector<8x8xf32>
    %51 = vector.extract_strided_slice %10 {offsets = [8, 16], sizes = [8, 8], strides = [1, 1]} : vector<16x32xf32> to vector<8x8xf32>
    %52 = vector.extract_strided_slice %10 {offsets = [8, 24], sizes = [8, 8], strides = [1, 1]} : vector<16x32xf32> to vector<8x8xf32>
    %53 = vector.shape_cast %45 : vector<8x8xf32> to vector<1x8x8xf32>
    %54 = vector.shape_cast %46 : vector<8x8xf32> to vector<1x8x8xf32>
    %55 = vector.shape_cast %47 : vector<8x8xf32> to vector<1x8x8xf32>
    %56 = vector.shape_cast %48 : vector<8x8xf32> to vector<1x8x8xf32>
    %57 = vector.shape_cast %49 : vector<8x8xf32> to vector<1x8x8xf32>
    %58 = vector.shape_cast %50 : vector<8x8xf32> to vector<1x8x8xf32>
    %59 = vector.shape_cast %51 : vector<8x8xf32> to vector<1x8x8xf32>
    %60 = vector.shape_cast %52 : vector<8x8xf32> to vector<1x8x8xf32>
    %61 = tpu.concatenate %53, %54, %55, %56, %57, %58, %59, %60 in 0 : vector<1x8x8xf32>, vector<1x8x8xf32>, vector<1x8x8xf32>, vector<1x8x8xf32>, vector<1x8x8xf32>, vector<1x8x8xf32>, vector<1x8x8xf32>, vector<1x8x8xf32> -> vector<8x8x8xf32>
    "tpu.trace_start"() <{level = 10 : i32, message = "bqd,bkd->bqk"}> : () -> ()
    %cst_6 = arith.constant dense<0.000000e+00> : vector<8x8x8xf32>
    %62 = tpu.matmul %27, %44, %cst_6 {dimension_numbers = #tpu.dot_dimension_numbers<[2], [2], [1], [1], [0, 0, 0, 1, 1, 1], [0], [0]>} : vector<8x8x8xf32>, vector<8x8x8xf32>, vector<8x8x8xf32> -> vector<8x8x8xf32>
    "tpu.trace_stop"() : () -> ()
    %cst_7 = arith.constant dense<0xFF800000> : vector<8x8xf32>
    %63 = vector.multi_reduction <maximumf>, %62, %cst_7 [2] : vector<8x8x8xf32> to vector<8x8xf32>
    %64 = vector.shape_cast %63 : vector<8x8xf32> to vector<8x8x1xf32>
    %65 = vector.broadcast %64 : vector<8x8x1xf32> to vector<8x8x8xf32>
    %66 = arith.subf %62, %65 : vector<8x8x8xf32>
    %67 = math.exp %66 : vector<8x8x8xf32>
    %cst_8 = arith.constant dense<0.000000e+00> : vector<8x8xf32>
    %68 = vector.multi_reduction <add>, %67, %cst_8 [2] : vector<8x8x8xf32> to vector<8x8xf32>
    %69 = vector.shape_cast %68 : vector<8x8xf32> to vector<8x8x1xf32>
    %70 = tpu.reciprocal %69 {approx = true} : vector<8x8x1xf32> -> vector<8x8x1xf32>
    %71 = vector.broadcast %70 : vector<8x8x1xf32> to vector<8x8x8xf32>
    %72 = arith.mulf %67, %71 : vector<8x8x8xf32>
    "tpu.trace_start"() <{level = 10 : i32, message = "bqk,bkd->bqd"}> : () -> ()
    %cst_9 = arith.constant dense<0.000000e+00> : vector<8x8x8xf32>
    %73 = tpu.matmul %72, %61, %cst_9 {dimension_numbers = #tpu.dot_dimension_numbers<[2], [1], [1], [2], [0, 0, 0, 1, 1, 2], [0], [0]>} : vector<8x8x8xf32>, vector<8x8x8xf32>, vector<8x8x8xf32> -> vector<8x8x8xf32>
    "tpu.trace_stop"() : () -> ()
    %c0_10 = arith.constant 0 : index
    %c0_11 = arith.constant 0 : index
    %74 = vector.load %arg4[%c0_10, %c0_11] : memref<32x32xf32, #tpu.memory_space<vmem>>, vector<32x32xf32>
    %cst_12 = arith.constant 0.000000e+00 : f32
    %75 = vector.broadcast %cst_12 : f32 to vector<8x32xf32>
    %76 = vector.extract_strided_slice %73 {offsets = [0, 0, 0], sizes = [1, 8, 8], strides = [1, 1, 1]} : vector<8x8x8xf32> to vector<1x8x8xf32>
    %77 = vector.shape_cast %76 : vector<1x8x8xf32> to vector<8x8xf32>
    %78 = vector.extract_strided_slice %74 {offsets = [0, 0], sizes = [8, 32], strides = [1, 1]} : vector<32x32xf32> to vector<8x32xf32>
    %cst_13 = arith.constant dense<0.000000e+00> : vector<8x32xf32>
    %79 = tpu.matmul %77, %78, %cst_13 {dimension_numbers = #tpu.dot_dimension_numbers<[1], [0], [0], [1], [0, 0, 1, 1], [], []>} : vector<8x8xf32>, vector<8x32xf32>, vector<8x32xf32> -> vector<8x32xf32>
    %80 = arith.addf %75, %79 : vector<8x32xf32>
    %81 = vector.extract_strided_slice %73 {offsets = [1, 0, 0], sizes = [1, 8, 8], strides = [1, 1, 1]} : vector<8x8x8xf32> to vector<1x8x8xf32>
    %82 = vector.shape_cast %81 : vector<1x8x8xf32> to vector<8x8xf32>
    %83 = vector.extract_strided_slice %74 {offsets = [8, 0], sizes = [8, 32], strides = [1, 1]} : vector<32x32xf32> to vector<8x32xf32>
    %cst_14 = arith.constant dense<0.000000e+00> : vector<8x32xf32>
    %84 = tpu.matmul %82, %83, %cst_14 {dimension_numbers = #tpu.dot_dimension_numbers<[1], [0], [0], [1], [0, 0, 1, 1], [], []>} : vector<8x8xf32>, vector<8x32xf32>, vector<8x32xf32> -> vector<8x32xf32>
    %85 = arith.addf %80, %84 : vector<8x32xf32>
    %86 = vector.extract_strided_slice %73 {offsets = [2, 0, 0], sizes = [1, 8, 8], strides = [1, 1, 1]} : vector<8x8x8xf32> to vector<1x8x8xf32>
    %87 = vector.shape_cast %86 : vector<1x8x8xf32> to vector<8x8xf32>
    %88 = vector.extract_strided_slice %74 {offsets = [16, 0], sizes = [8, 32], strides = [1, 1]} : vector<32x32xf32> to vector<8x32xf32>
    %cst_15 = arith.constant dense<0.000000e+00> : vector<8x32xf32>
    %89 = tpu.matmul %87, %88, %cst_15 {dimension_numbers = #tpu.dot_dimension_numbers<[1], [0], [0], [1], [0, 0, 1, 1], [], []>} : vector<8x8xf32>, vector<8x32xf32>, vector<8x32xf32> -> vector<8x32xf32>
    %90 = arith.addf %85, %89 : vector<8x32xf32>
    %91 = vector.extract_strided_slice %73 {offsets = [3, 0, 0], sizes = [1, 8, 8], strides = [1, 1, 1]} : vector<8x8x8xf32> to vector<1x8x8xf32>
    %92 = vector.shape_cast %91 : vector<1x8x8xf32> to vector<8x8xf32>
    %93 = vector.extract_strided_slice %74 {offsets = [24, 0], sizes = [8, 32], strides = [1, 1]} : vector<32x32xf32> to vector<8x32xf32>
    %cst_16 = arith.constant dense<0.000000e+00> : vector<8x32xf32>
    %94 = tpu.matmul %92, %93, %cst_16 {dimension_numbers = #tpu.dot_dimension_numbers<[1], [0], [0], [1], [0, 0, 1, 1], [], []>} : vector<8x8xf32>, vector<8x32xf32>, vector<8x32xf32> -> vector<8x32xf32>
    %95 = arith.addf %90, %94 : vector<8x32xf32>
    %cst_17 = arith.constant 0.000000e+00 : f32
    %96 = vector.broadcast %cst_17 : f32 to vector<8x32xf32>
    %97 = vector.extract_strided_slice %73 {offsets = [4, 0, 0], sizes = [1, 8, 8], strides = [1, 1, 1]} : vector<8x8x8xf32> to vector<1x8x8xf32>
    %98 = vector.shape_cast %97 : vector<1x8x8xf32> to vector<8x8xf32>
    %99 = vector.extract_strided_slice %74 {offsets = [0, 0], sizes = [8, 32], strides = [1, 1]} : vector<32x32xf32> to vector<8x32xf32>
    %cst_18 = arith.constant dense<0.000000e+00> : vector<8x32xf32>
    %100 = tpu.matmul %98, %99, %cst_18 {dimension_numbers = #tpu.dot_dimension_numbers<[1], [0], [0], [1], [0, 0, 1, 1], [], []>} : vector<8x8xf32>, vector<8x32xf32>, vector<8x32xf32> -> vector<8x32xf32>
    %101 = arith.addf %96, %100 : vector<8x32xf32>
    %102 = vector.extract_strided_slice %73 {offsets = [5, 0, 0], sizes = [1, 8, 8], strides = [1, 1, 1]} : vector<8x8x8xf32> to vector<1x8x8xf32>
    %103 = vector.shape_cast %102 : vector<1x8x8xf32> to vector<8x8xf32>
    %104 = vector.extract_strided_slice %74 {offsets = [8, 0], sizes = [8, 32], strides = [1, 1]} : vector<32x32xf32> to vector<8x32xf32>
    %cst_19 = arith.constant dense<0.000000e+00> : vector<8x32xf32>
    %105 = tpu.matmul %103, %104, %cst_19 {dimension_numbers = #tpu.dot_dimension_numbers<[1], [0], [0], [1], [0, 0, 1, 1], [], []>} : vector<8x8xf32>, vector<8x32xf32>, vector<8x32xf32> -> vector<8x32xf32>
    %106 = arith.addf %101, %105 : vector<8x32xf32>
    %107 = vector.extract_strided_slice %73 {offsets = [6, 0, 0], sizes = [1, 8, 8], strides = [1, 1, 1]} : vector<8x8x8xf32> to vector<1x8x8xf32>
    %108 = vector.shape_cast %107 : vector<1x8x8xf32> to vector<8x8xf32>
    %109 = vector.extract_strided_slice %74 {offsets = [16, 0], sizes = [8, 32], strides = [1, 1]} : vector<32x32xf32> to vector<8x32xf32>
    %cst_20 = arith.constant dense<0.000000e+00> : vector<8x32xf32>
    %110 = tpu.matmul %108, %109, %cst_20 {dimension_numbers = #tpu.dot_dimension_numbers<[1], [0], [0], [1], [0, 0, 1, 1], [], []>} : vector<8x8xf32>, vector<8x32xf32>, vector<8x32xf32> -> vector<8x32xf32>
    %111 = arith.addf %106, %110 : vector<8x32xf32>
    %112 = vector.extract_strided_slice %73 {offsets = [7, 0, 0], sizes = [1, 8, 8], strides = [1, 1, 1]} : vector<8x8x8xf32> to vector<1x8x8xf32>
    %113 = vector.shape_cast %112 : vector<1x8x8xf32> to vector<8x8xf32>
    %114 = vector.extract_strided_slice %74 {offsets = [24, 0], sizes = [8, 32], strides = [1, 1]} : vector<32x32xf32> to vector<8x32xf32>
    %cst_21 = arith.constant dense<0.000000e+00> : vector<8x32xf32>
    %115 = tpu.matmul %113, %114, %cst_21 {dimension_numbers = #tpu.dot_dimension_numbers<[1], [0], [0], [1], [0, 0, 1, 1], [], []>} : vector<8x8xf32>, vector<8x32xf32>, vector<8x32xf32> -> vector<8x32xf32>
    %116 = arith.addf %111, %115 : vector<8x32xf32>
    %117 = tpu.concatenate %95, %116 in 0 : vector<8x32xf32>, vector<8x32xf32> -> vector<16x32xf32>
    %c0_22 = arith.constant 0 : index
    %c0_23 = arith.constant 0 : index
    %118 = vector.load %arg5[%c0_22, %c0_23] : memref<1x32xf32, #tpu.memory_space<vmem>>, vector<1x32xf32>
    %119 = vector.broadcast %118 : vector<1x32xf32> to vector<16x32xf32>
    %120 = arith.addf %117, %119 : vector<16x32xf32>
    %121 = arith.addf %0, %120 : vector<16x32xf32>
    %c0_24 = arith.constant 0 : index
    %c0_25 = arith.constant 0 : index
    %122 = vector.load %arg10[%c0_24, %c0_25] : memref<1x32xf32, #tpu.memory_space<vmem>>, vector<1x32xf32>
    %c0_26 = arith.constant 0 : index
    %c0_27 = arith.constant 0 : index
    %123 = vector.load %arg11[%c0_26, %c0_27] : memref<1x32xf32, #tpu.memory_space<vmem>>, vector<1x32xf32>
    %cst_28 = arith.constant dense<0.000000e+00> : vector<16xf32>
    %124 = vector.multi_reduction <add>, %121, %cst_28 [1] : vector<16x32xf32> to vector<16xf32>
    %125 = vector.shape_cast %124 : vector<16xf32> to vector<16x1xf32>
    %cst_29 = arith.constant 3.200000e+01 : f32
    %126 = vector.broadcast %cst_29 : f32 to vector<16x1xf32>
    %127 = arith.divf %125, %126 : vector<16x1xf32>
    %128 = vector.broadcast %127 : vector<16x1xf32> to vector<16x32xf32>
    %129 = arith.subf %121, %128 : vector<16x32xf32>
    %130 = arith.mulf %129, %129 : vector<16x32xf32>
    %cst_30 = arith.constant dense<0.000000e+00> : vector<16xf32>
    %131 = vector.multi_reduction <add>, %130, %cst_30 [1] : vector<16x32xf32> to vector<16xf32>
    %132 = vector.shape_cast %131 : vector<16xf32> to vector<16x1xf32>
    %cst_31 = arith.constant 3.200000e+01 : f32
    %133 = vector.broadcast %cst_31 : f32 to vector<16x1xf32>
    %134 = arith.divf %132, %133 : vector<16x1xf32>
    %cst_32 = arith.constant 9.99999974E-6 : f32
    %135 = vector.broadcast %cst_32 : f32 to vector<16x1xf32>
    %136 = arith.addf %134, %135 : vector<16x1xf32>
    %137 = math.rsqrt %136 : vector<16x1xf32>
    %138 = vector.broadcast %137 : vector<16x1xf32> to vector<16x32xf32>
    %139 = arith.mulf %129, %138 : vector<16x32xf32>
    %140 = vector.broadcast %122 : vector<1x32xf32> to vector<16x32xf32>
    %141 = arith.mulf %139, %140 : vector<16x32xf32>
    %142 = vector.broadcast %123 : vector<1x32xf32> to vector<16x32xf32>
    %143 = arith.addf %141, %142 : vector<16x32xf32>
    %c0_33 = arith.constant 0 : index
    %c0_34 = arith.constant 0 : index
    %144 = vector.load %arg6[%c0_33, %c0_34] : memref<32x64xf32, #tpu.memory_space<vmem>>, vector<32x64xf32>
    %cst_35 = arith.constant dense<0.000000e+00> : vector<16x64xf32>
    %145 = tpu.matmul %143, %144, %cst_35 {dimension_numbers = #tpu.dot_dimension_numbers<[1], [0], [0], [1], [0, 0, 1, 1], [], []>} : vector<16x32xf32>, vector<32x64xf32>, vector<16x64xf32> -> vector<16x64xf32>
    %c0_36 = arith.constant 0 : index
    %c0_37 = arith.constant 0 : index
    %146 = vector.load %arg7[%c0_36, %c0_37] : memref<1x64xf32, #tpu.memory_space<vmem>>, vector<1x64xf32>
    %147 = vector.broadcast %146 : vector<1x64xf32> to vector<16x64xf32>
    %148 = arith.addf %145, %147 : vector<16x64xf32>
    %cst_38 = arith.constant 0.000000e+00 : f32
    %149 = vector.broadcast %cst_38 : f32 to vector<16x64xf32>
    %150 = arith.maximumf %148, %149 : vector<16x64xf32>
    %c0_39 = arith.constant 0 : index
    %c0_40 = arith.constant 0 : index
    %151 = vector.load %arg8[%c0_39, %c0_40] : memref<64x32xf32, #tpu.memory_space<vmem>>, vector<64x32xf32>
    %cst_41 = arith.constant dense<0.000000e+00> : vector<16x32xf32>
    %152 = tpu.matmul %150, %151, %cst_41 {dimension_numbers = #tpu.dot_dimension_numbers<[1], [0], [0], [1], [0, 0, 1, 1], [], []>} : vector<16x64xf32>, vector<64x32xf32>, vector<16x32xf32> -> vector<16x32xf32>
    %c0_42 = arith.constant 0 : index
    %c0_43 = arith.constant 0 : index
    %153 = vector.load %arg9[%c0_42, %c0_43] : memref<1x32xf32, #tpu.memory_space<vmem>>, vector<1x32xf32>
    %154 = vector.broadcast %153 : vector<1x32xf32> to vector<16x32xf32>
    %155 = arith.addf %152, %154 : vector<16x32xf32>
    %156 = arith.addf %143, %155 : vector<16x32xf32>
    %c0_44 = arith.constant 0 : index
    %c0_45 = arith.constant 0 : index
    %157 = vector.load %arg12[%c0_44, %c0_45] : memref<1x32xf32, #tpu.memory_space<vmem>>, vector<1x32xf32>
    %c0_46 = arith.constant 0 : index
    %c0_47 = arith.constant 0 : index
    %158 = vector.load %arg13[%c0_46, %c0_47] : memref<1x32xf32, #tpu.memory_space<vmem>>, vector<1x32xf32>
    %cst_48 = arith.constant dense<0.000000e+00> : vector<16xf32>
    %159 = vector.multi_reduction <add>, %156, %cst_48 [1] : vector<16x32xf32> to vector<16xf32>
    %160 = vector.shape_cast %159 : vector<16xf32> to vector<16x1xf32>
    %cst_49 = arith.constant 3.200000e+01 : f32
    %161 = vector.broadcast %cst_49 : f32 to vector<16x1xf32>
    %162 = arith.divf %160, %161 : vector<16x1xf32>
    %163 = vector.broadcast %162 : vector<16x1xf32> to vector<16x32xf32>
    %164 = arith.subf %156, %163 : vector<16x32xf32>
    %165 = arith.mulf %164, %164 : vector<16x32xf32>
    %cst_50 = arith.constant dense<0.000000e+00> : vector<16xf32>
    %166 = vector.multi_reduction <add>, %165, %cst_50 [1] : vector<16x32xf32> to vector<16xf32>
    %167 = vector.shape_cast %166 : vector<16xf32> to vector<16x1xf32>
    %cst_51 = arith.constant 3.200000e+01 : f32
    %168 = vector.broadcast %cst_51 : f32 to vector<16x1xf32>
    %169 = arith.divf %167, %168 : vector<16x1xf32>
    %cst_52 = arith.constant 9.99999974E-6 : f32
    %170 = vector.broadcast %cst_52 : f32 to vector<16x1xf32>
    %171 = arith.addf %169, %170 : vector<16x1xf32>
    %172 = math.rsqrt %171 : vector<16x1xf32>
    %173 = vector.broadcast %172 : vector<16x1xf32> to vector<16x32xf32>
    %174 = arith.mulf %164, %173 : vector<16x32xf32>
    %175 = vector.broadcast %157 : vector<1x32xf32> to vector<16x32xf32>
    %176 = arith.mulf %174, %175 : vector<16x32xf32>
    %177 = vector.broadcast %158 : vector<1x32xf32> to vector<16x32xf32>
    %178 = arith.addf %176, %177 : vector<16x32xf32>
    %c0_53 = arith.constant 0 : index
    %c0_54 = arith.constant 0 : index
    %179 = vector.load %arg14[%c0_53, %c0_54] : memref<16x32xf32, #tpu.memory_space<vmem>>, vector<16x32xf32>
    tpu.vector_store %arg14[%c0_53, %c0_54], %178 {strides = array<i32>} : memref<16x32xf32, #tpu.memory_space<vmem>>, vector<16x32xf32>,
    return
  }
  func.func @transform_0(%arg0: i32) -> (i32, i32) {
    %c0_i32 = arith.constant 0 : i32
    %c0_i32_0 = arith.constant 0 : i32
    return %arg0, %c0_i32 : i32, i32
  }
  func.func @transform_1(%arg0: i32) -> (i32, i32) {
    %c0_i32 = arith.constant 0 : i32
    %c0_i32_0 = arith.constant 0 : i32
    %c0_i32_1 = arith.constant 0 : i32
    return %c0_i32, %c0_i32_0 : i32, i32
  }
  func.func @transform_2(%arg0: i32) -> (i32, i32) {
    %c0_i32 = arith.constant 0 : i32
    %c0_i32_0 = arith.constant 0 : i32
    %c0_i32_1 = arith.constant 0 : i32
    return %c0_i32, %c0_i32_0 : i32, i32
  }
  func.func @transform_3(%arg0: i32) -> (i32, i32) {
    %c0_i32 = arith.constant 0 : i32
    %c0_i32_0 = arith.constant 0 : i32
    %c0_i32_1 = arith.constant 0 : i32
    return %c0_i32, %c0_i32_0 : i32, i32
  }
  func.func @transform_4(%arg0: i32) -> (i32, i32) {
    %c0_i32 = arith.constant 0 : i32
    %c0_i32_0 = arith.constant 0 : i32
    %c0_i32_1 = arith.constant 0 : i32
    return %c0_i32, %c0_i32_0 : i32, i32
  }
  func.func @transform_5(%arg0: i32) -> (i32, i32) {
    %c0_i32 = arith.constant 0 : i32
    %c0_i32_0 = arith.constant 0 : i32
    %c0_i32_1 = arith.constant 0 : i32
    return %c0_i32, %c0_i32_0 : i32, i32
  }
  func.func @transform_6(%arg0: i32) -> (i32, i32) {
    %c0_i32 = arith.constant 0 : i32
    %c0_i32_0 = arith.constant 0 : i32
    %c0_i32_1 = arith.constant 0 : i32
    return %c0_i32, %c0_i32_0 : i32, i32
  }
  func.func @transform_7(%arg0: i32) -> (i32, i32) {
    %c0_i32 = arith.constant 0 : i32
    %c0_i32_0 = arith.constant 0 : i32
    %c0_i32_1 = arith.constant 0 : i32
    return %c0_i32, %c0_i32_0 : i32, i32
  }
  func.func @transform_8(%arg0: i32) -> (i32, i32) {
    %c0_i32 = arith.constant 0 : i32
    %c0_i32_0 = arith.constant 0 : i32
    %c0_i32_1 = arith.constant 0 : i32
    return %c0_i32, %c0_i32_0 : i32, i32
  }
  func.func @transform_9(%arg0: i32) -> (i32, i32) {
    %c0_i32 = arith.constant 0 : i32
    %c0_i32_0 = arith.constant 0 : i32
    %c0_i32_1 = arith.constant 0 : i32
    return %c0_i32, %c0_i32_0 : i32, i32
  }
  func.func @transform_10(%arg0: i32) -> (i32, i32) {
    %c0_i32 = arith.constant 0 : i32
    %c0_i32_0 = arith.constant 0 : i32
    %c0_i32_1 = arith.constant 0 : i32
    return %c0_i32, %c0_i32_0 : i32, i32
  }
  func.func @transform_11(%arg0: i32) -> (i32, i32) {
    %c0_i32 = arith.constant 0 : i32
    %c0_i32_0 = arith.constant 0 : i32
    %c0_i32_1 = arith.constant 0 : i32
    return %c0_i32, %c0_i32_0 : i32, i32
  }
  func.func @transform_12(%arg0: i32) -> (i32, i32) {
    %c0_i32 = arith.constant 0 : i32
    %c0_i32_0 = arith.constant 0 : i32
    %c0_i32_1 = arith.constant 0 : i32
    return %c0_i32, %c0_i32_0 : i32, i32
  }
  func.func @transform_13(%arg0: i32) -> (i32, i32) {
    %c0_i32 = arith.constant 0 : i32
    %c0_i32_0 = arith.constant 0 : i32
    return %arg0, %c0_i32 : i32, i32
  }
}

</mosaic_0001>

<llo_original>
// kernel: tpu_custom_call.1
$region0: #{tpu_custom_call.1}
  #allocation0 [shape = 'u32[]', space=smem, size = 0x4, offset = 0x4, fixed_abs, tag = 'smem constant byte address 0x4 - core index']
  #allocation1 [shape = 'u32[144,128]{1,0:T(1,128)}', space=vmem, size = 0x12000, scoped, tag = 'internal scratch']
  %s0 = inlined_call_operand.hbm [shape: f32[16,32], index: 0, kind: input, shape index: {}]
  %s1 = inlined_call_operand.vmem [shape: f32[32,96], index: 1, kind: input, shape index: {}]
  %s2 = inlined_call_operand.vmem [shape: f32[1,96], index: 2, kind: input, shape index: {}]
  %s3 = inlined_call_operand.vmem [shape: f32[32,32], index: 3, kind: input, shape index: {}]
  %s4 = inlined_call_operand.vmem [shape: f32[1,32], index: 4, kind: input, shape index: {}]
  %s5 = inlined_call_operand.vmem [shape: f32[32,64], index: 5, kind: input, shape index: {}]
  %s6 = inlined_call_operand.vmem [shape: f32[1,64], index: 6, kind: input, shape index: {}]
  %s7 = inlined_call_operand.vmem [shape: f32[64,32], index: 7, kind: input, shape index: {}]
  %s8 = inlined_call_operand.vmem [shape: f32[1,32], index: 8, kind: input, shape index: {}]
  %s9 = inlined_call_operand.vmem [shape: f32[1,32], index: 9, kind: input, shape index: {}]
  %s10 = inlined_call_operand.vmem [shape: f32[1,32], index: 10, kind: input, shape index: {}]
  %s11 = inlined_call_operand.vmem [shape: f32[1,32], index: 11, kind: input, shape index: {}]
  %s12 = inlined_call_operand.vmem [shape: f32[1,32], index: 12, kind: input, shape index: {}]
  %s13 = inlined_call_operand.hbm [shape: f32[16,32], index: 13, kind: output, shape index: {}]
  %s14 = sld [smem:[#allocation0]]
  $region66: #{tpu_custom_call.1} parent=0
    _
  %s16 = ssub.s32 1, %s14
  %s17 = scalar_select 0, %s16, %s14
  $region1: #{tpu_custom_call.1} parent=0
    #allocation2 [shape = 'u8[8192]{0}', space=vmem, size = 0x2000, scoped, tag = 'input window, operand 0, single buffered']
    #allocation3 [shape = 's32[1]{0}', space=sflag, size = 0x4, scoped, tag = 'scoped memory for tpu_custom_call.1']
    #allocation4 [shape = 's32[1]{0}', space=sflag, size = 0x4, scoped, tag = 'scoped memory for tpu_custom_call.1']
    #allocation5 [shape = 'u8[8192]{0}', space=vmem, size = 0x2000, scoped, tag = 'output window, operand 0, single buffered']
    %18 = vsyncpa [#allocation3], 0
    %19 = vsyncpa [#allocation4], 0
    // Predicated region
    $region2: #{tpu_custom_call.1} parent=1 // pred_check
      _
    $region3: #{tpu_custom_call.1} parent=1 // pred_check_branch
      %21 = sbr.rel (0) target = $region5
    $region4: #{tpu_custom_call.1} parent=1 // pred_region
      %s23 = ssub.s32 256, 256
      %24 = vsyncadd [#allocation3], %s23
      %s25 = sshll.u32 [#allocation2], 4
      %s26 = int_to_ptr.vmem [resolvable:$true] %s25
      %31 = dma.hbm_to_vmem [thread:$0]  %s0, 256, %s26, [#allocation3], 128, 128, 8
    $region5: #{tpu_custom_call.1} parent=1 // pred_fallthru
      _
    // Predicated region
    $region6: #{tpu_custom_call.1} parent=1 // pred_check
      _
    $region7: #{tpu_custom_call.1} parent=1 // pred_check_branch
      %33 = sbr.rel (0) target = $region9
    $region8: #{tpu_custom_call.1} parent=1 // pred_region
      _
    $region9: #{tpu_custom_call.1} parent=1 // pred_fallthru
      _
    // Predicated region
    $region10: #{tpu_custom_call.1} parent=1 // pred_check
      _
    $region11: #{tpu_custom_call.1} parent=1 // pred_check_branch
      %35 = sbr.rel (0) target = $region13
    $region12: #{tpu_custom_call.1} parent=1 // pred_region
      _
    $region13: #{tpu_custom_call.1} parent=1 // pred_fallthru
      _
    // Predicated region
    $region14: #{tpu_custom_call.1} parent=1 // pred_check
      _
    $region15: #{tpu_custom_call.1} parent=1 // pred_check_branch
      %37 = sbr.rel (0) target = $region17
    $region16: #{tpu_custom_call.1} parent=1 // pred_region
      _
    $region17: #{tpu_custom_call.1} parent=1 // pred_fallthru
      _
    // Predicated region
    $region18: #{tpu_custom_call.1} parent=1 // pred_check
      _
    $region19: #{tpu_custom_call.1} parent=1 // pred_check_branch
      %39 = sbr.rel (0) target = $region21
    $region20: #{tpu_custom_call.1} parent=1 // pred_region
      _
    $region21: #{tpu_custom_call.1} parent=1 // pred_fallthru
      _
    // Predicated region
    $region22: #{tpu_custom_call.1} parent=1 // pred_check
      _
    $region23: #{tpu_custom_call.1} parent=1 // pred_check_branch
      %41 = sbr.rel (0) target = $region25
    $region24: #{tpu_custom_call.1} parent=1 // pred_region
      _
    $region25: #{tpu_custom_call.1} parent=1 // pred_fallthru
      _
    // Predicated region
    $region26: #{tpu_custom_call.1} parent=1 // pred_check
      _
    $region27: #{tpu_custom_call.1} parent=1 // pred_check_branch
      %43 = sbr.rel (0) target = $region29
    $region28: #{tpu_custom_call.1} parent=1 // pred_region
      _
    $region29: #{tpu_custom_call.1} parent=1 // pred_fallthru
      _
    // Predicated region
    $region30: #{tpu_custom_call.1} parent=1 // pred_check
      _
    $region31: #{tpu_custom_call.1} parent=1 // pred_check_branch
      %45 = sbr.rel (0) target = $region33
    $region32: #{tpu_custom_call.1} parent=1 // pred_region
      _
    $region33: #{tpu_custom_call.1} parent=1 // pred_fallthru
      _
    // Predicated region
    $region34: #{tpu_custom_call.1} parent=1 // pred_check
      _
    $region35: #{tpu_custom_call.1} parent=1 // pred_check_branch
      %47 = sbr.rel (0) target = $region37
    $region36: #{tpu_custom_call.1} parent=1 // pred_region
      _
    $region37: #{tpu_custom_call.1} parent=1 // pred_fallthru
      _
    // Predicated region
    $region38: #{tpu_custom_call.1} parent=1 // pred_check
      _
    $region39: #{tpu_custom_call.1} parent=1 // pred_check_branch
      %49 = sbr.rel (0) target = $region41
    $region40: #{tpu_custom_call.1} parent=1 // pred_region
      _
    $region41: #{tpu_custom_call.1} parent=1 // pred_fallthru
      _
    // Predicated region
    $region42: #{tpu_custom_call.1} parent=1 // pred_check
      _
    $region43: #{tpu_custom_call.1} parent=1 // pred_check_branch
      %51 = sbr.rel (0) target = $region45
    $region44: #{tpu_custom_call.1} parent=1 // pred_region
      _
    $region45: #{tpu_custom_call.1} parent=1 // pred_fallthru
      _
    // Predicated region
    $region46: #{tpu_custom_call.1} parent=1 // pred_check
      _
    $region47: #{tpu_custom_call.1} parent=1 // pred_check_branch
      %53 = sbr.rel (0) target = $region49
    $region48: #{tpu_custom_call.1} parent=1 // pred_region
      _
    $region49: #{tpu_custom_call.1} parent=1 // pred_fallthru
      _
    // Predicated region
    $region50: #{tpu_custom_call.1} parent=1 // pred_check
      _
    $region51: #{tpu_custom_call.1} parent=1 // pred_check_branch
      %55 = sbr.rel (0) target = $region53
    $region52: #{tpu_custom_call.1} parent=1 // pred_region
      _
    $region53: #{tpu_custom_call.1} parent=1 // pred_fallthru
      _
    // Predicated region
    $region54: #{tpu_custom_call.1} parent=1 // pred_check
      _
    $region55: #{tpu_custom_call.1} parent=1 // pred_check_branch
      %57 = sbr.rel (0) target = $region57
    $region56: #{tpu_custom_call.1} parent=1 // pred_region
      %58 = dma.done [#allocation3], 256
    $region57: #{tpu_custom_call.1} parent=1 // pred_fallthru
      _
    %v59 = vld [vmem:[#allocation2] sm:$0xff]
    %v60 = vld [vmem:[#allocation2 + $0x8] sm:$0xff]
    %v61 = vld [vmem:[%s1] sm:$0xff]
    %v62 = vld [vmem:[%s1 + $0x8] sm:$0xff]
    %v63 = vld [vmem:[%s1 + $0x10] sm:$0xff]
    %v64 = vld [vmem:[%s1 + $0x18] sm:$0xff]
    %v65 = vld [vmem:[%s2] sm:$0x1]
    %v67 = vlaneseq
    %v68 = vshrl.u32 %v67, 7
    %v69 = vsub.s32 0, %v68
    %v70 = vrot.slane %v65, %v69
    %vm72 = vcmask 261120
    %v74 = vsel %vm72, %v59, 0
    %v77 = vsel %vm72, %v60, 0
    %79 = vmatprep.subr.mxu0 0.0
    %80 = vmatpush1.msra.mxu0 %v61
    %81 = vmatprep.subr.mxu0 0.0
    %82 = vmatpush1.msra.mxu0 %v62
    %83 = vmatprep.subr.mxu0 0.0
    %84 = vmatpush1.msra.mxu0 %v63
    %85 = vmatprep.subr.mxu0 0.0
    %86 = vmatpush1.msra.mxu0 %v64
    %87 = vmatprep.subr.mxu0 0.0
    %88 = vmatpush1.msra.mxu0 0.0
    %89 = vmatprep.subr.mxu0 0.0
    %90 = vmatpush1.msra.mxu0 0.0
    %91 = vmatprep.subr.mxu0 0.0
    %92 = vmatpush1.msra.mxu0 0.0
    %93 = vmatprep.subr.mxu0 0.0
    %94 = vmatpush1.msra.mxu0 0.0
    %95 = vmatprep.subr.mxu0 0.0
    %96 = vmatpush1.msra.mxu0 0.0
    %97 = vmatprep.subr.mxu0 0.0
    %98 = vmatpush1.msra.mxu0 0.0
    %99 = vmatprep.subr.mxu0 0.0
    %100 = vmatpush1.msra.mxu0 0.0
    %101 = vmatprep.subr.mxu0 0.0
    %102 = vmatpush1.msra.mxu0 0.0
    %103 = vmatprep.subr.mxu0 0.0
    %104 = vmatpush1.msra.mxu0 0.0
    %105 = vmatprep.subr.mxu0 0.0
    %106 = vmatpush1.msra.mxu0 0.0
    %107 = vmatprep.subr.mxu0 0.0
    %108 = vmatpush1.msra.mxu0 0.0
    %109 = vmatprep.subr.mxu0 0.0
    %110 = vmatpush1.msra.mxu0 0.0
    %111 = vmatprep.subr.mxu0 0.0
    %112 = vmatpush1.msra.mxu0 0.0
    %113 = vmatprep.subr.mxu0 0.0
    %114 = vmatpush1.msra.mxu0 0.0
    %115 = vmatprep.subr.mxu0 0.0
    %116 = vmatpush1.msra.mxu0 0.0
    %117 = vmatprep.subr.mxu0 0.0
    %118 = vmatpush1.msra.mxu0 0.0
    %119 = vmatprep.subr.mxu0 0.0
    %120 = vmatpush1.msra.mxu0 0.0
    %121 = vmatprep.subr.mxu0 0.0
    %122 = vmatpush1.msra.mxu0 0.0
    %123 = vmatprep.subr.mxu0 0.0
    %124 = vmatpush1.msra.mxu0 0.0
    %125 = vmatprep.subr.mxu0 0.0
    %126 = vmatpush1.msra.mxu0 0.0
    %127 = vmatprep.subr.mxu0 0.0
    %128 = vmatpush1.msra.mxu0 0.0
    %129 = vmatprep.subr.mxu0 0.0
    %130 = vmatpush1.msra.mxu0 0.0
    %131 = vmatprep.subr.mxu0 0.0
    %132 = vmatpush1.msra.mxu0 0.0
    %133 = vmatprep.subr.mxu0 0.0
    %134 = vmatpush1.msra.mxu0 0.0
    %135 = vmatprep.subr.mxu0 0.0
    %136 = vmatpush1.msra.mxu0 0.0
    %137 = vmatprep.subr.mxu0 0.0
    %138 = vmatpush1.msra.mxu0 0.0
    %139 = vmatprep.subr.mxu0 0.0
    %140 = vmatpush1.msra.mxu0 0.0
    %141 = vmatprep.subr.mxu0 0.0
    %142 = vmatpush1.msra.mxu0 0.0
    %143 = vmatprep.mubr.f32.mxu0 0.0
    %144 = vmatmul.mubr.f32.gmra.mrb[0].mxu0 %v74
    %v145 = vpop.f32.mrb[0].mxu0
    %v146 = vadd.f32 %v70, %v145
    %v147 = vpop.f32.mrb[0].mxu0
    %148 = vmatprep.mubr.f32.mxu0 0.0
    %149 = vmatmul.mubr.f32.gmra.mrb[0].mxu0 %v77
    %v150 = vpop.f32.mrb[0].mxu0
    %v151 = vadd.f32 %v70, %v150
    %v152 = vpop.f32.mrb[0].mxu0
    %153 = vdwg.mxu0
    %v154 = vmul.f32 %v146, 0.35355338
    %v155 = vmul.f32 %v151, 0.35355338
    %157 = vrot.lane.b32.xlu0 %v154, 120
    %v158 = vpop.permute.xlu0 %157
    %159 = vrot.lane.b32.xlu0 %v154, 112
    %v160 = vpop.permute.xlu0 %159
    %161 = vrot.lane.b32.xlu0 %v154, 104
    %v162 = vpop.permute.xlu0 %161
    %164 = vrot.lane.b32.xlu0 %v155, 120
    %v165 = vpop.permute.xlu0 %164
    %166 = vrot.lane.b32.xlu0 %v155, 112
    %v167 = vpop.permute.xlu0 %166
    %168 = vrot.lane.b32.xlu0 %v155, 104
    %v169 = vpop.permute.xlu0 %168
    %171 = vrot.lane.b32.xlu0 %v146, 120
    %v172 = vpop.permute.xlu0 %171
    %173 = vrot.lane.b32.xlu0 %v146, 112
    %v174 = vpop.permute.xlu0 %173
    %175 = vrot.lane.b32.xlu0 %v146, 104
    %v176 = vpop.permute.xlu0 %175
    %178 = vrot.lane.b32.xlu0 %v151, 120
    %v179 = vpop.permute.xlu0 %178
    %180 = vrot.lane.b32.xlu0 %v151, 112
    %v181 = vpop.permute.xlu0 %180
    %182 = vrot.lane.b32.xlu0 %v151, 104
    %v183 = vpop.permute.xlu0 %182
    %184 = vrot.lane.b32.xlu0 %v146, 96
    %v185 = vpop.permute.xlu0 %184
    %vm186 = vcmask 64512
    %v187 = vsel %vm186, %v154, 0
    %v189 = vsel %vm186, %v185, 0
    %191 = vmatprep.subr.mxu0 0.0
    %192 = vmatpush1.xpose.msra.mxu0 %v189
    %193 = vmatprep.subr.mxu0 0.0
    %194 = vmatpush1.xpose.msra.mxu0 0.0
    %195 = vmatprep.subr.mxu0 0.0
    %196 = vmatpush1.xpose.msra.mxu0 0.0
    %197 = vmatprep.subr.mxu0 0.0
    %198 = vmatpush1.xpose.msra.mxu0 0.0
    %199 = vmatprep.subr.mxu0 0.0
    %200 = vmatpush1.xpose.msra.mxu0 0.0
    %201 = vmatprep.subr.mxu0 0.0
    %202 = vmatpush1.xpose.msra.mxu0 0.0
    %203 = vmatprep.subr.mxu0 0.0
    %204 = vmatpush1.xpose.msra.mxu0 0.0
    %205 = vmatprep.subr.mxu0 0.0
    %206 = vmatpush1.xpose.msra.mxu0 0.0
    %207 = vmatprep.subr.mxu0 0.0
    %208 = vmatpush1.xpose.msra.mxu0 0.0
    %209 = vmatprep.subr.mxu0 0.0
    %210 = vmatpush1.xpose.msra.mxu0 0.0
    %211 = vmatprep.subr.mxu0 0.0
    %212 = vmatpush1.xpose.msra.mxu0 0.0
    %213 = vmatprep.subr.mxu0 0.0
    %214 = vmatpush1.xpose.msra.mxu0 0.0
    %215 = vmatprep.subr.mxu0 0.0
    %216 = vmatpush1.xpose.msra.mxu0 0.0
    %217 = vmatprep.subr.mxu0 0.0
    %218 = vmatpush1.xpose.msra.mxu0 0.0
    %219 = vmatprep.subr.mxu0 0.0
    %220 = vmatpush1.xpose.msra.mxu0 0.0
    %221 = vmatprep.subr.mxu0 0.0
    %222 = vmatpush1.xpose.msra.mxu0 0.0
    %223 = vmatprep.subr.mxu0 0.0
    %224 = vmatpush1.xpose.msra.mxu0 0.0
    %225 = vmatprep.subr.mxu0 0.0
    %226 = vmatpush1.xpose.msra.mxu0 0.0
    %227 = vmatprep.subr.mxu0 0.0
    %228 = vmatpush1.xpose.msra.mxu0 0.0
    %229 = vmatprep.subr.mxu0 0.0
    %230 = vmatpush1.xpose.msra.mxu0 0.0
    %231 = vmatprep.subr.mxu0 0.0
    %232 = vmatpush1.xpose.msra.mxu0 0.0
    %233 = vmatprep.subr.mxu0 0.0
    %234 = vmatpush1.xpose.msra.mxu0 0.0
    %235 = vmatprep.subr.mxu0 0.0
    %236 = vmatpush1.xpose.msra.mxu0 0.0
    %237 = vmatprep.subr.mxu0 0.0
    %238 = vmatpush1.xpose.msra.mxu0 0.0
    %239 = vmatprep.subr.mxu0 0.0
    %240 = vmatpush1.xpose.msra.mxu0 0.0
    %241 = vmatprep.subr.mxu0 0.0
    %242 = vmatpush1.xpose.msra.mxu0 0.0
    %243 = vmatprep.subr.mxu0 0.0
    %244 = vmatpush1.xpose.msra.mxu0 0.0
    %245 = vmatprep.subr.mxu0 0.0
    %246 = vmatpush1.xpose.msra.mxu0 0.0
    %247 = vmatprep.subr.mxu0 0.0
    %248 = vmatpush1.xpose.msra.mxu0 0.0
    %249 = vmatprep.subr.mxu0 0.0
    %250 = vmatpush1.xpose.msra.mxu0 0.0
    %251 = vmatprep.subr.mxu0 0.0
    %252 = vmatpush1.xpose.msra.mxu0 0.0
    %253 = vmatprep.subr.mxu0 0.0
    %254 = vmatpush1.xpose.msra.mxu0 0.0
    %255 = vmatprep.mubr.f32.mxu0 0.0
    %256 = vmatmul.mubr.f32.gmra.mrb[0].mxu0 %v187
    %v257 = vpop.f32.mrb[0].mxu0
    %v258 = vadd.f32 0.0, %v257
    %v259 = vpop.f32.mrb[0].mxu0
    %260 = vdwg.mxu0
    %261 = vrot.lane.b32.xlu0 %v172, 96
    %v262 = vpop.permute.xlu0 %261
    %v263 = vsel %vm186, %v158, 0
    %v265 = vsel %vm186, %v262, 0
    %267 = vmatprep.subr.mxu0 0.0
    %268 = vmatpush1.xpose.msra.mxu0 %v265
    %269 = vmatprep.subr.mxu0 0.0
    %270 = vmatpush1.xpose.msra.mxu0 0.0
    %271 = vmatprep.subr.mxu0 0.0
    %272 = vmatpush1.xpose.msra.mxu0 0.0
    %273 = vmatprep.subr.mxu0 0.0
    %274 = vmatpush1.xpose.msra.mxu0 0.0
    %275 = vmatprep.subr.mxu0 0.0
    %276 = vmatpush1.xpose.msra.mxu0 0.0
    %277 = vmatprep.subr.mxu0 0.0
    %278 = vmatpush1.xpose.msra.mxu0 0.0
    %279 = vmatprep.subr.mxu0 0.0
    %280 = vmatpush1.xpose.msra.mxu0 0.0
    %281 = vmatprep.subr.mxu0 0.0
    %282 = vmatpush1.xpose.msra.mxu0 0.0
    %283 = vmatprep.subr.mxu0 0.0
    %284 = vmatpush1.xpose.msra.mxu0 0.0
    %285 = vmatprep.subr.mxu0 0.0
    %286 = vmatpush1.xpose.msra.mxu0 0.0
    %287 = vmatprep.subr.mxu0 0.0
    %288 = vmatpush1.xpose.msra.mxu0 0.0
    %289 = vmatprep.subr.mxu0 0.0
    %290 = vmatpush1.xpose.msra.mxu0 0.0
    %291 = vmatprep.subr.mxu0 0.0
    %292 = vmatpush1.xpose.msra.mxu0 0.0
    %293 = vmatprep.subr.mxu0 0.0
    %294 = vmatpush1.xpose.msra.mxu0 0.0
    %295 = vmatprep.subr.mxu0 0.0
    %296 = vmatpush1.xpose.msra.mxu0 0.0
    %297 = vmatprep.subr.mxu0 0.0
    %298 = vmatpush1.xpose.msra.mxu0 0.0
    %299 = vmatprep.subr.mxu0 0.0
    %300 = vmatpush1.xpose.msra.mxu0 0.0
    %301 = vmatprep.subr.mxu0 0.0
    %302 = vmatpush1.xpose.msra.mxu0 0.0
    %303 = vmatprep.subr.mxu0 0.0
    %304 = vmatpush1.xpose.msra.mxu0 0.0
    %305 = vmatprep.subr.mxu0 0.0
    %306 = vmatpush1.xpose.msra.mxu0 0.0
    %307 = vmatprep.subr.mxu0 0.0
    %308 = vmatpush1.xpose.msra.mxu0 0.0
    %309 = vmatprep.subr.mxu0 0.0
    %310 = vmatpush1.xpose.msra.mxu0 0.0
    %311 = vmatprep.subr.mxu0 0.0
    %312 = vmatpush1.xpose.msra.mxu0 0.0
    %313 = vmatprep.subr.mxu0 0.0
    %314 = vmatpush1.xpose.msra.mxu0 0.0
    %315 = vmatprep.subr.mxu0 0.0
    %316 = vmatpush1.xpose.msra.mxu0 0.0
    %317 = vmatprep.subr.mxu0 0.0
    %318 = vmatpush1.xpose.msra.mxu0 0.0
    %319 = vmatprep.subr.mxu0 0.0
    %320 = vmatpush1.xpose.msra.mxu0 0.0
    %321 = vmatprep.subr.mxu0 0.0
    %322 = vmatpush1.xpose.msra.mxu0 0.0
    %323 = vmatprep.subr.mxu0 0.0
    %324 = vmatpush1.xpose.msra.mxu0 0.0
    %325 = vmatprep.subr.mxu0 0.0
    %326 = vmatpush1.xpose.msra.mxu0 0.0
    %327 = vmatprep.subr.mxu0 0.0
    %328 = vmatpush1.xpose.msra.mxu0 0.0
    %329 = vmatprep.subr.mxu0 0.0
    %330 = vmatpush1.xpose.msra.mxu0 0.0
    %331 = vmatprep.mubr.f32.mxu0 0.0
    %332 = vmatmul.mubr.f32.gmra.mrb[0].mxu0 %v263
    %v333 = vpop.f32.mrb[0].mxu0
    %v334 = vadd.f32 0.0, %v333
    %v335 = vpop.f32.mrb[0].mxu0
    %336 = vdwg.mxu0
    %337 = vrot.lane.b32.xlu0 %v174, 96
    %v338 = vpop.permute.xlu0 %337
    %v339 = vsel %vm186, %v160, 0
    %v341 = vsel %vm186, %v338, 0
    %343 = vmatprep.subr.mxu0 0.0
    %344 = vmatpush1.xpose.msra.mxu0 %v341
    %345 = vmatprep.subr.mxu0 0.0
    %346 = vmatpush1.xpose.msra.mxu0 0.0
    %347 = vmatprep.subr.mxu0 0.0
    %348 = vmatpush1.xpose.msra.mxu0 0.0
    %349 = vmatprep.subr.mxu0 0.0
    %350 = vmatpush1.xpose.msra.mxu0 0.0
    %351 = vmatprep.subr.mxu0 0.0
    %352 = vmatpush1.xpose.msra.mxu0 0.0
    %353 = vmatprep.subr.mxu0 0.0
    %354 = vmatpush1.xpose.msra.mxu0 0.0
    %355 = vmatprep.subr.mxu0 0.0
    %356 = vmatpush1.xpose.msra.mxu0 0.0
    %357 = vmatprep.subr.mxu0 0.0
    %358 = vmatpush1.xpose.msra.mxu0 0.0
    %359 = vmatprep.subr.mxu0 0.0
    %360 = vmatpush1.xpose.msra.mxu0 0.0
    %361 = vmatprep.subr.mxu0 0.0
    %362 = vmatpush1.xpose.msra.mxu0 0.0
    %363 = vmatprep.subr.mxu0 0.0
    %364 = vmatpush1.xpose.msra.mxu0 0.0
    %365 = vmatprep.subr.mxu0 0.0
    %366 = vmatpush1.xpose.msra.mxu0 0.0
    %367 = vmatprep.subr.mxu0 0.0
    %368 = vmatpush1.xpose.msra.mxu0 0.0
    %369 = vmatprep.subr.mxu0 0.0
    %370 = vmatpush1.xpose.msra.mxu0 0.0
    %371 = vmatprep.subr.mxu0 0.0
    %372 = vmatpush1.xpose.msra.mxu0 0.0
    %373 = vmatprep.subr.mxu0 0.0
    %374 = vmatpush1.xpose.msra.mxu0 0.0
    %375 = vmatprep.subr.mxu0 0.0
    %376 = vmatpush1.xpose.msra.mxu0 0.0
    %377 = vmatprep.subr.mxu0 0.0
    %378 = vmatpush1.xpose.msra.mxu0 0.0
    %379 = vmatprep.subr.mxu0 0.0
    %380 = vmatpush1.xpose.msra.mxu0 0.0
    %381 = vmatprep.subr.mxu0 0.0
    %382 = vmatpush1.xpose.msra.mxu0 0.0
    %383 = vmatprep.subr.mxu0 0.0
    %384 = vmatpush1.xpose.msra.mxu0 0.0
    %385 = vmatprep.subr.mxu0 0.0
    %386 = vmatpush1.xpose.msra.mxu0 0.0
    %387 = vmatprep.subr.mxu0 0.0
    %388 = vmatpush1.xpose.msra.mxu0 0.0
    %389 = vmatprep.subr.mxu0 0.0
    %390 = vmatpush1.xpose.msra.mxu0 0.0
    %391 = vmatprep.subr.mxu0 0.0
    %392 = vmatpush1.xpose.msra.mxu0 0.0
    %393 = vmatprep.subr.mxu0 0.0
    %394 = vmatpush1.xpose.msra.mxu0 0.0
    %395 = vmatprep.subr.mxu0 0.0
    %396 = vmatpush1.xpose.msra.mxu0 0.0
    %397 = vmatprep.subr.mxu0 0.0
    %398 = vmatpush1.xpose.msra.mxu0 0.0
    %399 = vmatprep.subr.mxu0 0.0
    %400 = vmatpush1.xpose.msra.mxu0 0.0
    %401 = vmatprep.subr.mxu0 0.0
    %402 = vmatpush1.xpose.msra.mxu0 0.0
    %403 = vmatprep.subr.mxu0 0.0
    %404 = vmatpush1.xpose.msra.mxu0 0.0
    %405 = vmatprep.subr.mxu0 0.0
    %406 = vmatpush1.xpose.msra.mxu0 0.0
    %407 = vmatprep.mubr.f32.mxu0 0.0
    %408 = vmatmul.mubr.f32.gmra.mrb[0].mxu0 %v339
    %v409 = vpop.f32.mrb[0].mxu0
    %v410 = vadd.f32 0.0, %v409
    %v411 = vpop.f32.mrb[0].mxu0
    %412 = vdwg.mxu0
    %413 = vrot.lane.b32.xlu0 %v176, 96
    %v414 = vpop.permute.xlu0 %413
    %v415 = vsel %vm186, %v162, 0
    %v417 = vsel %vm186, %v414, 0
    %419 = vmatprep.subr.mxu0 0.0
    %420 = vmatpush1.xpose.msra.mxu0 %v417
    %421 = vmatprep.subr.mxu0 0.0
    %422 = vmatpush1.xpose.msra.mxu0 0.0
    %423 = vmatprep.subr.mxu0 0.0
    %424 = vmatpush1.xpose.msra.mxu0 0.0
    %425 = vmatprep.subr.mxu0 0.0
    %426 = vmatpush1.xpose.msra.mxu0 0.0
    %427 = vmatprep.subr.mxu0 0.0
    %428 = vmatpush1.xpose.msra.mxu0 0.0
    %429 = vmatprep.subr.mxu0 0.0
    %430 = vmatpush1.xpose.msra.mxu0 0.0
    %431 = vmatprep.subr.mxu0 0.0
    %432 = vmatpush1.xpose.msra.mxu0 0.0
    %433 = vmatprep.subr.mxu0 0.0
    %434 = vmatpush1.xpose.msra.mxu0 0.0
    %435 = vmatprep.subr.mxu0 0.0
    %436 = vmatpush1.xpose.msra.mxu0 0.0
    %437 = vmatprep.subr.mxu0 0.0
    %438 = vmatpush1.xpose.msra.mxu0 0.0
    %439 = vmatprep.subr.mxu0 0.0
    %440 = vmatpush1.xpose.msra.mxu0 0.0
    %441 = vmatprep.subr.mxu0 0.0
    %442 = vmatpush1.xpose.msra.mxu0 0.0
    %443 = vmatprep.subr.mxu0 0.0
    %444 = vmatpush1.xpose.msra.mxu0 0.0
    %445 = vmatprep.subr.mxu0 0.0
    %446 = vmatpush1.xpose.msra.mxu0 0.0
    %447 = vmatprep.subr.mxu0 0.0
    %448 = vmatpush1.xpose.msra.mxu0 0.0
    %449 = vmatprep.subr.mxu0 0.0
    %450 = vmatpush1.xpose.msra.mxu0 0.0
    %451 = vmatprep.subr.mxu0 0.0
    %452 = vmatpush1.xpose.msra.mxu0 0.0
    %453 = vmatprep.subr.mxu0 0.0
    %454 = vmatpush1.xpose.msra.mxu0 0.0
    %455 = vmatprep.subr.mxu0 0.0
    %456 = vmatpush1.xpose.msra.mxu0 0.0
    %457 = vmatprep.subr.mxu0 0.0
    %458 = vmatpush1.xpose.msra.mxu0 0.0
    %459 = vmatprep.subr.mxu0 0.0
    %460 = vmatpush1.xpose.msra.mxu0 0.0
    %461 = vmatprep.subr.mxu0 0.0
    %462 = vmatpush1.xpose.msra.mxu0 0.0
    %463 = vmatprep.subr.mxu0 0.0
    %464 = vmatpush1.xpose.msra.mxu0 0.0
    %465 = vmatprep.subr.mxu0 0.0
    %466 = vmatpush1.xpose.msra.mxu0 0.0
    %467 = vmatprep.subr.mxu0 0.0
    %468 = vmatpush1.xpose.msra.mxu0 0.0
    %469 = vmatprep.subr.mxu0 0.0
    %470 = vmatpush1.xpose.msra.mxu0 0.0
    %471 = vmatprep.subr.mxu0 0.0
    %472 = vmatpush1.xpose.msra.mxu0 0.0
    %473 = vmatprep.subr.mxu0 0.0
    %474 = vmatpush1.xpose.msra.mxu0 0.0
    %475 = vmatprep.subr.mxu0 0.0
    %476 = vmatpush1.xpose.msra.mxu0 0.0
    %477 = vmatprep.subr.mxu0 0.0
    %478 = vmatpush1.xpose.msra.mxu0 0.0
    %479 = vmatprep.subr.mxu0 0.0
    %480 = vmatpush1.xpose.msra.mxu0 0.0
    %481 = vmatprep.subr.mxu0 0.0
    %482 = vmatpush1.xpose.msra.mxu0 0.0
    %483 = vmatprep.mubr.f32.mxu0 0.0
    %484 = vmatmul.mubr.f32.gmra.mrb[0].mxu0 %v415
    %v485 = vpop.f32.mrb[0].mxu0
    %v486 = vadd.f32 0.0, %v485
    %v487 = vpop.f32.mrb[0].mxu0
    %488 = vdwg.mxu0
    %489 = vrot.lane.b32.xlu0 %v151, 96
    %v490 = vpop.permute.xlu0 %489
    %v491 = vsel %vm186, %v155, 0
    %v493 = vsel %vm186, %v490, 0
    %495 = vmatprep.subr.mxu0 0.0
    %496 = vmatpush1.xpose.msra.mxu0 %v493
    %497 = vmatprep.subr.mxu0 0.0
    %498 = vmatpush1.xpose.msra.mxu0 0.0
    %499 = vmatprep.subr.mxu0 0.0
    %500 = vmatpush1.xpose.msra.mxu0 0.0
    %501 = vmatprep.subr.mxu0 0.0
    %502 = vmatpush1.xpose.msra.mxu0 0.0
    %503 = vmatprep.subr.mxu0 0.0
    %504 = vmatpush1.xpose.msra.mxu0 0.0
    %505 = vmatprep.subr.mxu0 0.0
    %506 = vmatpush1.xpose.msra.mxu0 0.0
    %507 = vmatprep.subr.mxu0 0.0
    %508 = vmatpush1.xpose.msra.mxu0 0.0
    %509 = vmatprep.subr.mxu0 0.0
    %510 = vmatpush1.xpose.msra.mxu0 0.0
    %511 = vmatprep.subr.mxu0 0.0
    %512 = vmatpush1.xpose.msra.mxu0 0.0
    %513 = vmatprep.subr.mxu0 0.0
    %514 = vmatpush1.xpose.msra.mxu0 0.0
    %515 = vmatprep.subr.mxu0 0.0
    %516 = vmatpush1.xpose.msra.mxu0 0.0
    %517 = vmatprep.subr.mxu0 0.0
    %518 = vmatpush1.xpose.msra.mxu0 0.0
    %519 = vmatprep.subr.mxu0 0.0
    %520 = vmatpush1.xpose.msra.mxu0 0.0
    %521 = vmatprep.subr.mxu0 0.0
    %522 = vmatpush1.xpose.msra.mxu0 0.0
    %523 = vmatprep.subr.mxu0 0.0
    %524 = vmatpush1.xpose.msra.mxu0 0.0
    %525 = vmatprep.subr.mxu0 0.0
    %526 = vmatpush1.xpose.msra.mxu0 0.0
    %527 = vmatprep.subr.mxu0 0.0
    %528 = vmatpush1.xpose.msra.mxu0 0.0
    %529 = vmatprep.subr.mxu0 0.0
    %530 = vmatpush1.xpose.msra.mxu0 0.0
    %531 = vmatprep.subr.mxu0 0.0
    %532 = vmatpush1.xpose.msra.mxu0 0.0
    %533 = vmatprep.subr.mxu0 0.0
    %534 = vmatpush1.xpose.msra.mxu0 0.0
    %535 = vmatprep.subr.mxu0 0.0
    %536 = vmatpush1.xpose.msra.mxu0 0.0
    %537 = vmatprep.subr.mxu0 0.0
    %538 = vmatpush1.xpose.msra.mxu0 0.0
    %539 = vmatprep.subr.mxu0 0.0
    %540 = vmatpush1.xpose.msra.mxu0 0.0
    %541 = vmatprep.subr.mxu0 0.0
    %542 = vmatpush1.xpose.msra.mxu0 0.0
    %543 = vmatprep.subr.mxu0 0.0
    %544 = vmatpush1.xpose.msra.mxu0 0.0
    %545 = vmatprep.subr.mxu0 0.0
    %546 = vmatpush1.xpose.msra.mxu0 0.0
    %547 = vmatprep.subr.mxu0 0.0
    %548 = vmatpush1.xpose.msra.mxu0 0.0
    %549 = vmatprep.subr.mxu0 0.0
    %550 = vmatpush1.xpose.msra.mxu0 0.0
    %551 = vmatprep.subr.mxu0 0.0
    %552 = vmatpush1.xpose.msra.mxu0 0.0
    %553 = vmatprep.subr.mxu0 0.0
    %554 = vmatpush1.xpose.msra.mxu0 0.0
    %555 = vmatprep.subr.mxu0 0.0
    %556 = vmatpush1.xpose.msra.mxu0 0.0
    %557 = vmatprep.subr.mxu0 0.0
    %558 = vmatpush1.xpose.msra.mxu0 0.0
    %559 = vmatprep.mubr.f32.mxu0 0.0
    %560 = vmatmul.mubr.f32.gmra.mrb[0].mxu0 %v491
    %v561 = vpop.f32.mrb[0].mxu0
    %v562 = vadd.f32 0.0, %v561
    %v563 = vpop.f32.mrb[0].mxu0
    %564 = vdwg.mxu0
    %565 = vrot.lane.b32.xlu0 %v179, 96
    %v566 = vpop.permute.xlu0 %565
    %v567 = vsel %vm186, %v165, 0
    %v569 = vsel %vm186, %v566, 0
    %571 = vmatprep.subr.mxu0 0.0
    %572 = vmatpush1.xpose.msra.mxu0 %v569
    %573 = vmatprep.subr.mxu0 0.0
    %574 = vmatpush1.xpose.msra.mxu0 0.0
    %575 = vmatprep.subr.mxu0 0.0
    %576 = vmatpush1.xpose.msra.mxu0 0.0
    %577 = vmatprep.subr.mxu0 0.0
    %578 = vmatpush1.xpose.msra.mxu0 0.0
    %579 = vmatprep.subr.mxu0 0.0
    %580 = vmatpush1.xpose.msra.mxu0 0.0
    %581 = vmatprep.subr.mxu0 0.0
    %582 = vmatpush1.xpose.msra.mxu0 0.0
    %583 = vmatprep.subr.mxu0 0.0
    %584 = vmatpush1.xpose.msra.mxu0 0.0
    %585 = vmatprep.subr.mxu0 0.0
    %586 = vmatpush1.xpose.msra.mxu0 0.0
    %587 = vmatprep.subr.mxu0 0.0
    %588 = vmatpush1.xpose.msra.mxu0 0.0
    %589 = vmatprep.subr.mxu0 0.0
    %590 = vmatpush1.xpose.msra.mxu0 0.0
    %591 = vmatprep.subr.mxu0 0.0
    %592 = vmatpush1.xpose.msra.mxu0 0.0
    %593 = vmatprep.subr.mxu0 0.0
    %594 = vmatpush1.xpose.msra.mxu0 0.0
    %595 = vmatprep.subr.mxu0 0.0
    %596 = vmatpush1.xpose.msra.mxu0 0.0
    %597 = vmatprep.subr.mxu0 0.0
    %598 = vmatpush1.xpose.msra.mxu0 0.0
    %599 = vmatprep.subr.mxu0 0.0
    %600 = vmatpush1.xpose.msra.mxu0 0.0
    %601 = vmatprep.subr.mxu0 0.0
    %602 = vmatpush1.xpose.msra.mxu0 0.0
    %603 = vmatprep.subr.mxu0 0.0
    %604 = vmatpush1.xpose.msra.mxu0 0.0
    %605 = vmatprep.subr.mxu0 0.0
    %606 = vmatpush1.xpose.msra.mxu0 0.0
    %607 = vmatprep.subr.mxu0 0.0
    %608 = vmatpush1.xpose.msra.mxu0 0.0
    %609 = vmatprep.subr.mxu0 0.0
    %610 = vmatpush1.xpose.msra.mxu0 0.0
    %611 = vmatprep.subr.mxu0 0.0
    %612 = vmatpush1.xpose.msra.mxu0 0.0
    %613 = vmatprep.subr.mxu0 0.0
    %614 = vmatpush1.xpose.msra.mxu0 0.0
    %615 = vmatprep.subr.mxu0 0.0
    %616 = vmatpush1.xpose.msra.mxu0 0.0
    %617 = vmatprep.subr.mxu0 0.0
    %618 = vmatpush1.xpose.msra.mxu0 0.0
    %619 = vmatprep.subr.mxu0 0.0
    %620 = vmatpush1.xpose.msra.mxu0 0.0
    %621 = vmatprep.subr.mxu0 0.0
    %622 = vmatpush1.xpose.msra.mxu0 0.0
    %623 = vmatprep.subr.mxu0 0.0
    %624 = vmatpush1.xpose.msra.mxu0 0.0
    %625 = vmatprep.subr.mxu0 0.0
    %626 = vmatpush1.xpose.msra.mxu0 0.0
    %627 = vmatprep.subr.mxu0 0.0
    %628 = vmatpush1.xpose.msra.mxu0 0.0
    %629 = vmatprep.subr.mxu0 0.0
    %630 = vmatpush1.xpose.msra.mxu0 0.0
    %631 = vmatprep.subr.mxu0 0.0
    %632 = vmatpush1.xpose.msra.mxu0 0.0
    %633 = vmatprep.subr.mxu0 0.0
    %634 = vmatpush1.xpose.msra.mxu0 0.0
    %635 = vmatprep.mubr.f32.mxu0 0.0
    %636 = vmatmul.mubr.f32.gmra.mrb[0].mxu0 %v567
    %v637 = vpop.f32.mrb[0].mxu0
    %v638 = vadd.f32 0.0, %v637
    %v639 = vpop.f32.mrb[0].mxu0
    %640 = vdwg.mxu0
    %641 = vrot.lane.b32.xlu0 %v181, 96
    %v642 = vpop.permute.xlu0 %641
    %v643 = vsel %vm186, %v167, 0
    %v645 = vsel %vm186, %v642, 0
    %647 = vmatprep.subr.mxu0 0.0
    %648 = vmatpush1.xpose.msra.mxu0 %v645
    %649 = vmatprep.subr.mxu0 0.0
    %650 = vmatpush1.xpose.msra.mxu0 0.0
    %651 = vmatprep.subr.mxu0 0.0
    %652 = vmatpush1.xpose.msra.mxu0 0.0
    %653 = vmatprep.subr.mxu0 0.0
    %654 = vmatpush1.xpose.msra.mxu0 0.0
    %655 = vmatprep.subr.mxu0 0.0
    %656 = vmatpush1.xpose.msra.mxu0 0.0
    %657 = vmatprep.subr.mxu0 0.0
    %658 = vmatpush1.xpose.msra.mxu0 0.0
    %659 = vmatprep.subr.mxu0 0.0
    %660 = vmatpush1.xpose.msra.mxu0 0.0
    %661 = vmatprep.subr.mxu0 0.0
    %662 = vmatpush1.xpose.msra.mxu0 0.0
    %663 = vmatprep.subr.mxu0 0.0
    %664 = vmatpush1.xpose.msra.mxu0 0.0
    %665 = vmatprep.subr.mxu0 0.0
    %666 = vmatpush1.xpose.msra.mxu0 0.0
    %667 = vmatprep.subr.mxu0 0.0
    %668 = vmatpush1.xpose.msra.mxu0 0.0
    %669 = vmatprep.subr.mxu0 0.0
    %670 = vmatpush1.xpose.msra.mxu0 0.0
    %671 = vmatprep.subr.mxu0 0.0
    %672 = vmatpush1.xpose.msra.mxu0 0.0
    %673 = vmatprep.subr.mxu0 0.0
    %674 = vmatpush1.xpose.msra.mxu0 0.0
    %675 = vmatprep.subr.mxu0 0.0
    %676 = vmatpush1.xpose.msra.mxu0 0.0
    %677 = vmatprep.subr.mxu0 0.0
    %678 = vmatpush1.xpose.msra.mxu0 0.0
    %679 = vmatprep.subr.mxu0 0.0
    %680 = vmatpush1.xpose.msra.mxu0 0.0
    %681 = vmatprep.subr.mxu0 0.0
    %682 = vmatpush1.xpose.msra.mxu0 0.0
    %683 = vmatprep.subr.mxu0 0.0
    %684 = vmatpush1.xpose.msra.mxu0 0.0
    %685 = vmatprep.subr.mxu0 0.0
    %686 = vmatpush1.xpose.msra.mxu0 0.0
    %687 = vmatprep.subr.mxu0 0.0
    %688 = vmatpush1.xpose.msra.mxu0 0.0
    %689 = vmatprep.subr.mxu0 0.0
    %690 = vmatpush1.xpose.msra.mxu0 0.0
    %691 = vmatprep.subr.mxu0 0.0
    %692 = vmatpush1.xpose.msra.mxu0 0.0
    %693 = vmatprep.subr.mxu0 0.0
    %694 = vmatpush1.xpose.msra.mxu0 0.0
    %695 = vmatprep.subr.mxu0 0.0
    %696 = vmatpush1.xpose.msra.mxu0 0.0
    %697 = vmatprep.subr.mxu0 0.0
    %698 = vmatpush1.xpose.msra.mxu0 0.0
    %699 = vmatprep.subr.mxu0 0.0
    %700 = vmatpush1.xpose.msra.mxu0 0.0
    %701 = vmatprep.subr.mxu0 0.0
    %702 = vmatpush1.xpose.msra.mxu0 0.0
    %703 = vmatprep.subr.mxu0 0.0
    %704 = vmatpush1.xpose.msra.mxu0 0.0
    %705 = vmatprep.subr.mxu0 0.0
    %706 = vmatpush1.xpose.msra.mxu0 0.0
    %707 = vmatprep.subr.mxu0 0.0
    %708 = vmatpush1.xpose.msra.mxu0 0.0
    %709 = vmatprep.subr.mxu0 0.0
    %710 = vmatpush1.xpose.msra.mxu0 0.0
    %711 = vmatprep.mubr.f32.mxu0 0.0
    %712 = vmatmul.mubr.f32.gmra.mrb[0].mxu0 %v643
    %v713 = vpop.f32.mrb[0].mxu0
    %v714 = vadd.f32 0.0, %v713
    %v715 = vpop.f32.mrb[0].mxu0
    %716 = vdwg.mxu0
    %717 = vrot.lane.b32.xlu0 %v183, 96
    %v718 = vpop.permute.xlu0 %717
    %v719 = vsel %vm186, %v169, 0
    %v721 = vsel %vm186, %v718, 0
    %723 = vmatprep.subr.mxu0 0.0
    %724 = vmatpush1.xpose.msra.mxu0 %v721
    %725 = vmatprep.subr.mxu0 0.0
    %726 = vmatpush1.xpose.msra.mxu0 0.0
    %727 = vmatprep.subr.mxu0 0.0
    %728 = vmatpush1.xpose.msra.mxu0 0.0
    %729 = vmatprep.subr.mxu0 0.0
    %730 = vmatpush1.xpose.msra.mxu0 0.0
    %731 = vmatprep.subr.mxu0 0.0
    %732 = vmatpush1.xpose.msra.mxu0 0.0
    %733 = vmatprep.subr.mxu0 0.0
    %734 = vmatpush1.xpose.msra.mxu0 0.0
    %735 = vmatprep.subr.mxu0 0.0
    %736 = vmatpush1.xpose.msra.mxu0 0.0
    %737 = vmatprep.subr.mxu0 0.0
    %738 = vmatpush1.xpose.msra.mxu0 0.0
    %739 = vmatprep.subr.mxu0 0.0
    %740 = vmatpush1.xpose.msra.mxu0 0.0
    %741 = vmatprep.subr.mxu0 0.0
    %742 = vmatpush1.xpose.msra.mxu0 0.0
    %743 = vmatprep.subr.mxu0 0.0
    %744 = vmatpush1.xpose.msra.mxu0 0.0
    %745 = vmatprep.subr.mxu0 0.0
    %746 = vmatpush1.xpose.msra.mxu0 0.0
    %747 = vmatprep.subr.mxu0 0.0
    %748 = vmatpush1.xpose.msra.mxu0 0.0
    %749 = vmatprep.subr.mxu0 0.0
    %750 = vmatpush1.xpose.msra.mxu0 0.0
    %751 = vmatprep.subr.mxu0 0.0
    %752 = vmatpush1.xpose.msra.mxu0 0.0
    %753 = vmatprep.subr.mxu0 0.0
    %754 = vmatpush1.xpose.msra.mxu0 0.0
    %755 = vmatprep.subr.mxu0 0.0
    %756 = vmatpush1.xpose.msra.mxu0 0.0
    %757 = vmatprep.subr.mxu0 0.0
    %758 = vmatpush1.xpose.msra.mxu0 0.0
    %759 = vmatprep.subr.mxu0 0.0
    %760 = vmatpush1.xpose.msra.mxu0 0.0
    %761 = vmatprep.subr.mxu0 0.0
    %762 = vmatpush1.xpose.msra.mxu0 0.0
    %763 = vmatprep.subr.mxu0 0.0
    %764 = vmatpush1.xpose.msra.mxu0 0.0
    %765 = vmatprep.subr.mxu0 0.0
    %766 = vmatpush1.xpose.msra.mxu0 0.0
    %767 = vmatprep.subr.mxu0 0.0
    %768 = vmatpush1.xpose.msra.mxu0 0.0
    %769 = vmatprep.subr.mxu0 0.0
    %770 = vmatpush1.xpose.msra.mxu0 0.0
    %771 = vmatprep.subr.mxu0 0.0
    %772 = vmatpush1.xpose.msra.mxu0 0.0
    %773 = vmatprep.subr.mxu0 0.0
    %774 = vmatpush1.xpose.msra.mxu0 0.0
    %775 = vmatprep.subr.mxu0 0.0
    %776 = vmatpush1.xpose.msra.mxu0 0.0
    %777 = vmatprep.subr.mxu0 0.0
    %778 = vmatpush1.xpose.msra.mxu0 0.0
    %779 = vmatprep.subr.mxu0 0.0
    %780 = vmatpush1.xpose.msra.mxu0 0.0
    %781 = vmatprep.subr.mxu0 0.0
    %782 = vmatpush1.xpose.msra.mxu0 0.0
    %783 = vmatprep.subr.mxu0 0.0
    %784 = vmatpush1.xpose.msra.mxu0 0.0
    %785 = vmatprep.subr.mxu0 0.0
    %786 = vmatpush1.xpose.msra.mxu0 0.0
    %787 = vmatprep.mubr.f32.mxu0 0.0
    %788 = vmatmul.mubr.f32.gmra.mrb[0].mxu0 %v719
    %v789 = vpop.f32.mrb[0].mxu0
    %v790 = vadd.f32 0.0, %v789
    %v791 = vpop.f32.mrb[0].mxu0
    %792 = vdwg.mxu0
    %v793 = vsel %vm186, %v258, -inf
    %794 = vmax.xlane.f32.xlu0 %v793
    %v795 = vpop.xlane.xlu0 %794
    %v796 = vsel %vm186, %v334, -inf
    %797 = vmax.xlane.f32.xlu0 %v796
    %v798 = vpop.xlane.xlu0 %797
    %v799 = vsel %vm186, %v410, -inf
    %800 = vmax.xlane.f32.xlu0 %v799
    %v801 = vpop.xlane.xlu0 %800
    %v802 = vsel %vm186, %v486, -inf
    %803 = vmax.xlane.f32.xlu0 %v802
    %v804 = vpop.xlane.xlu0 %803
    %v805 = vsel %vm186, %v562, -inf
    %806 = vmax.xlane.f32.xlu0 %v805
    %v807 = vpop.xlane.xlu0 %806
    %v808 = vsel %vm186, %v638, -inf
    %809 = vmax.xlane.f32.xlu0 %v808
    %v810 = vpop.xlane.xlu0 %809
    %v811 = vsel %vm186, %v714, -inf
    %812 = vmax.xlane.f32.xlu0 %v811
    %v813 = vpop.xlane.xlu0 %812
    %v814 = vsel %vm186, %v790, -inf
    %815 = vmax.xlane.f32.xlu0 %v814
    %v816 = vpop.xlane.xlu0 %815
    %v817 = vsub.f32 %v258, %v795
    %v818 = vsub.f32 %v334, %v798
    %v819 = vsub.f32 %v410, %v801
    %v820 = vsub.f32 %v486, %v804
    %v821 = vsub.f32 %v562, %v807
    %v822 = vsub.f32 %v638, %v810
    %v823 = vsub.f32 %v714, %v813
    %v824 = vsub.f32 %v790, %v816
    %v825 = vmul.f32 %v817, 1.442695
    %v826 = vpow.pop %v825
    %v827 = vmul.f32 %v818, 1.442695
    %v828 = vpow.pop %v827
    %v829 = vmul.f32 %v819, 1.442695
    %v830 = vpow.pop %v829
    %v831 = vmul.f32 %v820, 1.442695
    %v832 = vpow.pop %v831
    %v833 = vmul.f32 %v821, 1.442695
    %v834 = vpow.pop %v833
    %v835 = vmul.f32 %v822, 1.442695
    %v836 = vpow.pop %v835
    %v837 = vmul.f32 %v823, 1.442695
    %v838 = vpow.pop %v837
    %v839 = vmul.f32 %v824, 1.442695
    %v840 = vpow.pop %v839
    %v841 = vsel %vm186, %v826, 0.0
    %842 = vadd.xlane.f32.xlu0 %v841
    %v843 = vpop.xlane.xlu0 %842
    %v844 = vsel %vm186, %v828, 0.0
    %845 = vadd.xlane.f32.xlu0 %v844
    %v846 = vpop.xlane.xlu0 %845
    %v847 = vsel %vm186, %v830, 0.0
    %848 = vadd.xlane.f32.xlu0 %v847
    %v849 = vpop.xlane.xlu0 %848
    %v850 = vsel %vm186, %v832, 0.0
    %851 = vadd.xlane.f32.xlu0 %v850
    %v852 = vpop.xlane.xlu0 %851
    %v853 = vsel %vm186, %v834, 0.0
    %854 = vadd.xlane.f32.xlu0 %v853
    %v855 = vpop.xlane.xlu0 %854
    %v856 = vsel %vm186, %v836, 0.0
    %857 = vadd.xlane.f32.xlu0 %v856
    %v858 = vpop.xlane.xlu0 %857
    %v859 = vsel %vm186, %v838, 0.0
    %860 = vadd.xlane.f32.xlu0 %v859
    %v861 = vpop.xlane.xlu0 %860
    %v862 = vsel %vm186, %v840, 0.0
    %863 = vadd.xlane.f32.xlu0 %v862
    %v864 = vpop.xlane.xlu0 %863
    %v865 = vrcp.pop %v843
    %v866 = vrcp.pop %v846
    %v867 = vrcp.pop %v849
    %v868 = vrcp.pop %v852
    %v869 = vrcp.pop %v855
    %v870 = vrcp.pop %v858
    %v871 = vrcp.pop %v861
    %v872 = vrcp.pop %v864
    %v873 = vmul.f32 %v826, %v865
    %v874 = vmul.f32 %v828, %v866
    %v875 = vmul.f32 %v830, %v867
    %v876 = vmul.f32 %v832, %v868
    %v877 = vmul.f32 %v834, %v869
    %v878 = vmul.f32 %v836, %v870
    %v879 = vmul.f32 %v838, %v871
    %v880 = vmul.f32 %v840, %v872
    %881 = vrot.lane.b32.xlu0 %v146, 64
    %v882 = vpop.permute.xlu0 %881
    %v885 = vsel %vm186, %v873, 0
    %887 = vmatprep.subr.mxu0 0.0
    %888 = vmatpush1.msra.mxu0 %v882
    %889 = vmatprep.subr.mxu0 0.0
    %890 = vmatpush1.msra.mxu0 0.0
    %891 = vmatprep.subr.mxu0 0.0
    %892 = vmatpush1.msra.mxu0 0.0
    %893 = vmatprep.subr.mxu0 0.0
    %894 = vmatpush1.msra.mxu0 0.0
    %895 = vmatprep.subr.mxu0 0.0
    %896 = vmatpush1.msra.mxu0 0.0
    %897 = vmatprep.subr.mxu0 0.0
    %898 = vmatpush1.msra.mxu0 0.0
    %899 = vmatprep.subr.mxu0 0.0
    %900 = vmatpush1.msra.mxu0 0.0
    %901 = vmatprep.subr.mxu0 0.0
    %902 = vmatpush1.msra.mxu0 0.0
    %903 = vmatprep.subr.mxu0 0.0
    %904 = vmatpush1.msra.mxu0 0.0
    %905 = vmatprep.subr.mxu0 0.0
    %906 = vmatpush1.msra.mxu0 0.0
    %907 = vmatprep.subr.mxu0 0.0
    %908 = vmatpush1.msra.mxu0 0.0
    %909 = vmatprep.subr.mxu0 0.0
    %910 = vmatpush1.msra.mxu0 0.0
    %911 = vmatprep.subr.mxu0 0.0
    %912 = vmatpush1.msra.mxu0 0.0
    %913 = vmatprep.subr.mxu0 0.0
    %914 = vmatpush1.msra.mxu0 0.0
    %915 = vmatprep.subr.mxu0 0.0
    %916 = vmatpush1.msra.mxu0 0.0
    %917 = vmatprep.subr.mxu0 0.0
    %918 = vmatpush1.msra.mxu0 0.0
    %919 = vmatprep.subr.mxu0 0.0
    %920 = vmatpush1.msra.mxu0 0.0
    %921 = vmatprep.subr.mxu0 0.0
    %922 = vmatpush1.msra.mxu0 0.0
    %923 = vmatprep.subr.mxu0 0.0
    %924 = vmatpush1.msra.mxu0 0.0
    %925 = vmatprep.subr.mxu0 0.0
    %926 = vmatpush1.msra.mxu0 0.0
    %927 = vmatprep.subr.mxu0 0.0
    %928 = vmatpush1.msra.mxu0 0.0
    %929 = vmatprep.subr.mxu0 0.0
    %930 = vmatpush1.msra.mxu0 0.0
    %931 = vmatprep.subr.mxu0 0.0
    %932 = vmatpush1.msra.mxu0 0.0
    %933 = vmatprep.subr.mxu0 0.0
    %934 = vmatpush1.msra.mxu0 0.0
    %935 = vmatprep.subr.mxu0 0.0
    %936 = vmatpush1.msra.mxu0 0.0
    %937 = vmatprep.subr.mxu0 0.0
    %938 = vmatpush1.msra.mxu0 0.0
    %939 = vmatprep.subr.mxu0 0.0
    %940 = vmatpush1.msra.mxu0 0.0
    %941 = vmatprep.subr.mxu0 0.0
    %942 = vmatpush1.msra.mxu0 0.0
    %943 = vmatprep.subr.mxu0 0.0
    %944 = vmatpush1.msra.mxu0 0.0
    %945 = vmatprep.subr.mxu0 0.0
    %946 = vmatpush1.msra.mxu0 0.0
    %947 = vmatprep.subr.mxu0 0.0
    %948 = vmatpush1.msra.mxu0 0.0
    %949 = vmatprep.subr.mxu0 0.0
    %950 = vmatpush1.msra.mxu0 0.0
    %951 = vmatprep.mubr.f32.mxu0 0.0
    %952 = vmatmul.mubr.f32.gmra.mrb[0].mxu0 %v885
    %v953 = vpop.f32.mrb[0].mxu0
    %v954 = vadd.f32 0.0, %v953
    %v955 = vpop.f32.mrb[0].mxu0
    %956 = vdwg.mxu0
    %957 = vrot.lane.b32.xlu0 %v172, 64
    %v958 = vpop.permute.xlu0 %957
    %v961 = vsel %vm186, %v874, 0
    %963 = vmatprep.subr.mxu0 0.0
    %964 = vmatpush1.msra.mxu0 %v958
    %965 = vmatprep.subr.mxu0 0.0
    %966 = vmatpush1.msra.mxu0 0.0
    %967 = vmatprep.subr.mxu0 0.0
    %968 = vmatpush1.msra.mxu0 0.0
    %969 = vmatprep.subr.mxu0 0.0
    %970 = vmatpush1.msra.mxu0 0.0
    %971 = vmatprep.subr.mxu0 0.0
    %972 = vmatpush1.msra.mxu0 0.0
    %973 = vmatprep.subr.mxu0 0.0
    %974 = vmatpush1.msra.mxu0 0.0
    %975 = vmatprep.subr.mxu0 0.0
    %976 = vmatpush1.msra.mxu0 0.0
    %977 = vmatprep.subr.mxu0 0.0
    %978 = vmatpush1.msra.mxu0 0.0
    %979 = vmatprep.subr.mxu0 0.0
    %980 = vmatpush1.msra.mxu0 0.0
    %981 = vmatprep.subr.mxu0 0.0
    %982 = vmatpush1.msra.mxu0 0.0
    %983 = vmatprep.subr.mxu0 0.0
    %984 = vmatpush1.msra.mxu0 0.0
    %985 = vmatprep.subr.mxu0 0.0
    %986 = vmatpush1.msra.mxu0 0.0
    %987 = vmatprep.subr.mxu0 0.0
    %988 = vmatpush1.msra.mxu0 0.0
    %989 = vmatprep.subr.mxu0 0.0
    %990 = vmatpush1.msra.mxu0 0.0
    %991 = vmatprep.subr.mxu0 0.0
    %992 = vmatpush1.msra.mxu0 0.0
    %993 = vmatprep.subr.mxu0 0.0
    %994 = vmatpush1.msra.mxu0 0.0
    %995 = vmatprep.subr.mxu0 0.0
    %996 = vmatpush1.msra.mxu0 0.0
    %997 = vmatprep.subr.mxu0 0.0
    %998 = vmatpush1.msra.mxu0 0.0
    %999 = vmatprep.subr.mxu0 0.0
    %1000 = vmatpush1.msra.mxu0 0.0
    %1001 = vmatprep.subr.mxu0 0.0
    %1002 = vmatpush1.msra.mxu0 0.0
    %1003 = vmatprep.subr.mxu0 0.0
    %1004 = vmatpush1.msra.mxu0 0.0
    %1005 = vmatprep.subr.mxu0 0.0
    %1006 = vmatpush1.msra.mxu0 0.0
    %1007 = vmatprep.subr.mxu0 0.0
    %1008 = vmatpush1.msra.mxu0 0.0
    %1009 = vmatprep.subr.mxu0 0.0
    %1010 = vmatpush1.msra.mxu0 0.0
    %1011 = vmatprep.subr.mxu0 0.0
    %1012 = vmatpush1.msra.mxu0 0.0
    %1013 = vmatprep.subr.mxu0 0.0
    %1014 = vmatpush1.msra.mxu0 0.0
    %1015 = vmatprep.subr.mxu0 0.0
    %1016 = vmatpush1.msra.mxu0 0.0
    %1017 = vmatprep.subr.mxu0 0.0
    %1018 = vmatpush1.msra.mxu0 0.0
    %1019 = vmatprep.subr.mxu0 0.0
    %1020 = vmatpush1.msra.mxu0 0.0
    %1021 = vmatprep.subr.mxu0 0.0
    %1022 = vmatpush1.msra.mxu0 0.0
    %1023 = vmatprep.subr.mxu0 0.0
    %1024 = vmatpush1.msra.mxu0 0.0
    %1025 = vmatprep.subr.mxu0 0.0
    %1026 = vmatpush1.msra.mxu0 0.0
    %1027 = vmatprep.mubr.f32.mxu0 0.0
    %1028 = vmatmul.mubr.f32.gmra.mrb[0].mxu0 %v961
    %v1029 = vpop.f32.mrb[0].mxu0
    %v1030 = vadd.f32 0.0, %v1029
    %v1031 = vpop.f32.mrb[0].mxu0
    %1032 = vdwg.mxu0
    %1033 = vrot.lane.b32.xlu0 %v174, 64
    %v1034 = vpop.permute.xlu0 %1033
    %v1037 = vsel %vm186, %v875, 0
    %1039 = vmatprep.subr.mxu0 0.0
    %1040 = vmatpush1.msra.mxu0 %v1034
    %1041 = vmatprep.subr.mxu0 0.0
    %1042 = vmatpush1.msra.mxu0 0.0
    %1043 = vmatprep.subr.mxu0 0.0
    %1044 = vmatpush1.msra.mxu0 0.0
    %1045 = vmatprep.subr.mxu0 0.0
    %1046 = vmatpush1.msra.mxu0 0.0
    %1047 = vmatprep.subr.mxu0 0.0
    %1048 = vmatpush1.msra.mxu0 0.0
    %1049 = vmatprep.subr.mxu0 0.0
    %1050 = vmatpush1.msra.mxu0 0.0
    %1051 = vmatprep.subr.mxu0 0.0
    %1052 = vmatpush1.msra.mxu0 0.0
    %1053 = vmatprep.subr.mxu0 0.0
    %1054 = vmatpush1.msra.mxu0 0.0
    %1055 = vmatprep.subr.mxu0 0.0
    %1056 = vmatpush1.msra.mxu0 0.0
    %1057 = vmatprep.subr.mxu0 0.0
    %1058 = vmatpush1.msra.mxu0 0.0
    %1059 = vmatprep.subr.mxu0 0.0
    %1060 = vmatpush1.msra.mxu0 0.0
    %1061 = vmatprep.subr.mxu0 0.0
    %1062 = vmatpush1.msra.mxu0 0.0
    %1063 = vmatprep.subr.mxu0 0.0
    %1064 = vmatpush1.msra.mxu0 0.0
    %1065 = vmatprep.subr.mxu0 0.0
    %1066 = vmatpush1.msra.mxu0 0.0
    %1067 = vmatprep.subr.mxu0 0.0
    %1068 = vmatpush1.msra.mxu0 0.0
    %1069 = vmatprep.subr.mxu0 0.0
    %1070 = vmatpush1.msra.mxu0 0.0
    %1071 = vmatprep.subr.mxu0 0.0
    %1072 = vmatpush1.msra.mxu0 0.0
    %1073 = vmatprep.subr.mxu0 0.0
    %1074 = vmatpush1.msra.mxu0 0.0
    %1075 = vmatprep.subr.mxu0 0.0
    %1076 = vmatpush1.msra.mxu0 0.0
    %1077 = vmatprep.subr.mxu0 0.0
    %1078 = vmatpush1.msra.mxu0 0.0
    %1079 = vmatprep.subr.mxu0 0.0
    %1080 = vmatpush1.msra.mxu0 0.0
    %1081 = vmatprep.subr.mxu0 0.0
    %1082 = vmatpush1.msra.mxu0 0.0
    %1083 = vmatprep.subr.mxu0 0.0
    %1084 = vmatpush1.msra.mxu0 0.0
    %1085 = vmatprep.subr.mxu0 0.0
    %1086 = vmatpush1.msra.mxu0 0.0
    %1087 = vmatprep.subr.mxu0 0.0
    %1088 = vmatpush1.msra.mxu0 0.0
    %1089 = vmatprep.subr.mxu0 0.0
    %1090 = vmatpush1.msra.mxu0 0.0
    %1091 = vmatprep.subr.mxu0 0.0
    %1092 = vmatpush1.msra.mxu0 0.0
    %1093 = vmatprep.subr.mxu0 0.0
    %1094 = vmatpush1.msra.mxu0 0.0
    %1095 = vmatprep.subr.mxu0 0.0
    %1096 = vmatpush1.msra.mxu0 0.0
    %1097 = vmatprep.subr.mxu0 0.0
    %1098 = vmatpush1.msra.mxu0 0.0
    %1099 = vmatprep.subr.mxu0 0.0
    %1100 = vmatpush1.msra.mxu0 0.0
    %1101 = vmatprep.subr.mxu0 0.0
    %1102 = vmatpush1.msra.mxu0 0.0
    %1103 = vmatprep.mubr.f32.mxu0 0.0
    %1104 = vmatmul.mubr.f32.gmra.mrb[0].mxu0 %v1037
    %v1105 = vpop.f32.mrb[0].mxu0
    %v1106 = vadd.f32 0.0, %v1105
    %v1107 = vpop.f32.mrb[0].mxu0
    %1108 = vdwg.mxu0
    %1109 = vrot.lane.b32.xlu0 %v176, 64
    %v1110 = vpop.permute.xlu0 %1109
    %v1113 = vsel %vm186, %v876, 0
    %1115 = vmatprep.subr.mxu0 0.0
    %1116 = vmatpush1.msra.mxu0 %v1110
    %1117 = vmatprep.subr.mxu0 0.0
    %1118 = vmatpush1.msra.mxu0 0.0
    %1119 = vmatprep.subr.mxu0 0.0
    %1120 = vmatpush1.msra.mxu0 0.0
    %1121 = vmatprep.subr.mxu0 0.0
    %1122 = vmatpush1.msra.mxu0 0.0
    %1123 = vmatprep.subr.mxu0 0.0
    %1124 = vmatpush1.msra.mxu0 0.0
    %1125 = vmatprep.subr.mxu0 0.0
    %1126 = vmatpush1.msra.mxu0 0.0
    %1127 = vmatprep.subr.mxu0 0.0
    %1128 = vmatpush1.msra.mxu0 0.0
    %1129 = vmatprep.subr.mxu0 0.0
    %1130 = vmatpush1.msra.mxu0 0.0
    %1131 = vmatprep.subr.mxu0 0.0
    %1132 = vmatpush1.msra.mxu0 0.0
    %1133 = vmatprep.subr.mxu0 0.0
    %1134 = vmatpush1.msra.mxu0 0.0
    %1135 = vmatprep.subr.mxu0 0.0
    %1136 = vmatpush1.msra.mxu0 0.0
    %1137 = vmatprep.subr.mxu0 0.0
    %1138 = vmatpush1.msra.mxu0 0.0
    %1139 = vmatprep.subr.mxu0 0.0
    %1140 = vmatpush1.msra.mxu0 0.0
    %1141 = vmatprep.subr.mxu0 0.0
    %1142 = vmatpush1.msra.mxu0 0.0
    %1143 = vmatprep.subr.mxu0 0.0
    %1144 = vmatpush1.msra.mxu0 0.0
    %1145 = vmatprep.subr.mxu0 0.0
    %1146 = vmatpush1.msra.mxu0 0.0
    %1147 = vmatprep.subr.mxu0 0.0
    %1148 = vmatpush1.msra.mxu0 0.0
    %1149 = vmatprep.subr.mxu0 0.0
    %1150 = vmatpush1.msra.mxu0 0.0
    %1151 = vmatprep.subr.mxu0 0.0
    %1152 = vmatpush1.msra.mxu0 0.0
    %1153 = vmatprep.subr.mxu0 0.0
    %1154 = vmatpush1.msra.mxu0 0.0
    %1155 = vmatprep.subr.mxu0 0.0
    %1156 = vmatpush1.msra.mxu0 0.0
    %1157 = vmatprep.subr.mxu0 0.0
    %1158 = vmatpush1.msra.mxu0 0.0
    %1159 = vmatprep.subr.mxu0 0.0
    %1160 = vmatpush1.msra.mxu0 0.0
    %1161 = vmatprep.subr.mxu0 0.0
    %1162 = vmatpush1.msra.mxu0 0.0
    %1163 = vmatprep.subr.mxu0 0.0
    %1164 = vmatpush1.msra.mxu0 0.0
    %1165 = vmatprep.subr.mxu0 0.0
    %1166 = vmatpush1.msra.mxu0 0.0
    %1167 = vmatprep.subr.mxu0 0.0
    %1168 = vmatpush1.msra.mxu0 0.0
    %1169 = vmatprep.subr.mxu0 0.0
    %1170 = vmatpush1.msra.mxu0 0.0
    %1171 = vmatprep.subr.mxu0 0.0
    %1172 = vmatpush1.msra.mxu0 0.0
    %1173 = vmatprep.subr.mxu0 0.0
    %1174 = vmatpush1.msra.mxu0 0.0
    %1175 = vmatprep.subr.mxu0 0.0
    %1176 = vmatpush1.msra.mxu0 0.0
    %1177 = vmatprep.subr.mxu0 0.0
    %1178 = vmatpush1.msra.mxu0 0.0
    %1179 = vmatprep.mubr.f32.mxu0 0.0
    %1180 = vmatmul.mubr.f32.gmra.mrb[0].mxu0 %v1113
    %v1181 = vpop.f32.mrb[0].mxu0
    %v1182 = vadd.f32 0.0, %v1181
    %v1183 = vpop.f32.mrb[0].mxu0
    %1184 = vdwg.mxu0
    %1185 = vrot.lane.b32.xlu0 %v151, 64
    %v1186 = vpop.permute.xlu0 %1185
    %v1189 = vsel %vm186, %v877, 0
    %1191 = vmatprep.subr.mxu0 0.0
    %1192 = vmatpush1.msra.mxu0 %v1186
    %1193 = vmatprep.subr.mxu0 0.0
    %1194 = vmatpush1.msra.mxu0 0.0
    %1195 = vmatprep.subr.mxu0 0.0
    %1196 = vmatpush1.msra.mxu0 0.0
    %1197 = vmatprep.subr.mxu0 0.0
    %1198 = vmatpush1.msra.mxu0 0.0
    %1199 = vmatprep.subr.mxu0 0.0
    %1200 = vmatpush1.msra.mxu0 0.0
    %1201 = vmatprep.subr.mxu0 0.0
    %1202 = vmatpush1.msra.mxu0 0.0
    %1203 = vmatprep.subr.mxu0 0.0
    %1204 = vmatpush1.msra.mxu0 0.0
    %1205 = vmatprep.subr.mxu0 0.0
    %1206 = vmatpush1.msra.mxu0 0.0
    %1207 = vmatprep.subr.mxu0 0.0
    %1208 = vmatpush1.msra.mxu0 0.0
    %1209 = vmatprep.subr.mxu0 0.0
    %1210 = vmatpush1.msra.mxu0 0.0
    %1211 = vmatprep.subr.mxu0 0.0
    %1212 = vmatpush1.msra.mxu0 0.0
    %1213 = vmatprep.subr.mxu0 0.0
    %1214 = vmatpush1.msra.mxu0 0.0
    %1215 = vmatprep.subr.mxu0 0.0
    %1216 = vmatpush1.msra.mxu0 0.0
    %1217 = vmatprep.subr.mxu0 0.0
    %1218 = vmatpush1.msra.mxu0 0.0
    %1219 = vmatprep.subr.mxu0 0.0
    %1220 = vmatpush1.msra.mxu0 0.0
    %1221 = vmatprep.subr.mxu0 0.0
    %1222 = vmatpush1.msra.mxu0 0.0
    %1223 = vmatprep.subr.mxu0 0.0
    %1224 = vmatpush1.msra.mxu0 0.0
    %1225 = vmatprep.subr.mxu0 0.0
    %1226 = vmatpush1.msra.mxu0 0.0
    %1227 = vmatprep.subr.mxu0 0.0
    %1228 = vmatpush1.msra.mxu0 0.0
    %1229 = vmatprep.subr.mxu0 0.0
    %1230 = vmatpush1.msra.mxu0 0.0
    %1231 = vmatprep.subr.mxu0 0.0
    %1232 = vmatpush1.msra.mxu0 0.0
    %1233 = vmatprep.subr.mxu0 0.0
    %1234 = vmatpush1.msra.mxu0 0.0
    %1235 = vmatprep.subr.mxu0 0.0
    %1236 = vmatpush1.msra.mxu0 0.0
    %1237 = vmatprep.subr.mxu0 0.0
    %1238 = vmatpush1.msra.mxu0 0.0
    %1239 = vmatprep.subr.mxu0 0.0
    %1240 = vmatpush1.msra.mxu0 0.0
    %1241 = vmatprep.subr.mxu0 0.0
    %1242 = vmatpush1.msra.mxu0 0.0
    %1243 = vmatprep.subr.mxu0 0.0
    %1244 = vmatpush1.msra.mxu0 0.0
    %1245 = vmatprep.subr.mxu0 0.0
    %1246 = vmatpush1.msra.mxu0 0.0
    %1247 = vmatprep.subr.mxu0 0.0
    %1248 = vmatpush1.msra.mxu0 0.0
    %1249 = vmatprep.subr.mxu0 0.0
    %1250 = vmatpush1.msra.mxu0 0.0
    %1251 = vmatprep.subr.mxu0 0.0
    %1252 = vmatpush1.msra.mxu0 0.0
    %1253 = vmatprep.subr.mxu0 0.0
    %1254 = vmatpush1.msra.mxu0 0.0
    %1255 = vmatprep.mubr.f32.mxu0 0.0
    %1256 = vmatmul.mubr.f32.gmra.mrb[0].mxu0 %v1189
    %v1257 = vpop.f32.mrb[0].mxu0
    %v1258 = vadd.f32 0.0, %v1257
    %v1259 = vpop.f32.mrb[0].mxu0
    %1260 = vdwg.mxu0
    %1261 = vrot.lane.b32.xlu0 %v179, 64
    %v1262 = vpop.permute.xlu0 %1261
    %v1265 = vsel %vm186, %v878, 0
    %1267 = vmatprep.subr.mxu0 0.0
    %1268 = vmatpush1.msra.mxu0 %v1262
    %1269 = vmatprep.subr.mxu0 0.0
    %1270 = vmatpush1.msra.mxu0 0.0
    %1271 = vmatprep.subr.mxu0 0.0
    %1272 = vmatpush1.msra.mxu0 0.0
    %1273 = vmatprep.subr.mxu0 0.0
    %1274 = vmatpush1.msra.mxu0 0.0
    %1275 = vmatprep.subr.mxu0 0.0
    %1276 = vmatpush1.msra.mxu0 0.0
    %1277 = vmatprep.subr.mxu0 0.0
    %1278 = vmatpush1.msra.mxu0 0.0
    %1279 = vmatprep.subr.mxu0 0.0
    %1280 = vmatpush1.msra.mxu0 0.0
    %1281 = vmatprep.subr.mxu0 0.0
    %1282 = vmatpush1.msra.mxu0 0.0
    %1283 = vmatprep.subr.mxu0 0.0
    %1284 = vmatpush1.msra.mxu0 0.0
    %1285 = vmatprep.subr.mxu0 0.0
    %1286 = vmatpush1.msra.mxu0 0.0
    %1287 = vmatprep.subr.mxu0 0.0
    %1288 = vmatpush1.msra.mxu0 0.0
    %1289 = vmatprep.subr.mxu0 0.0
    %1290 = vmatpush1.msra.mxu0 0.0
    %1291 = vmatprep.subr.mxu0 0.0
    %1292 = vmatpush1.msra.mxu0 0.0
    %1293 = vmatprep.subr.mxu0 0.0
    %1294 = vmatpush1.msra.mxu0 0.0
    %1295 = vmatprep.subr.mxu0 0.0
    %1296 = vmatpush1.msra.mxu0 0.0
    %1297 = vmatprep.subr.mxu0 0.0
    %1298 = vmatpush1.msra.mxu0 0.0
    %1299 = vmatprep.subr.mxu0 0.0
    %1300 = vmatpush1.msra.mxu0 0.0
    %1301 = vmatprep.subr.mxu0 0.0
    %1302 = vmatpush1.msra.mxu0 0.0
    %1303 = vmatprep.subr.mxu0 0.0
    %1304 = vmatpush1.msra.mxu0 0.0
    %1305 = vmatprep.subr.mxu0 0.0
    %1306 = vmatpush1.msra.mxu0 0.0
    %1307 = vmatprep.subr.mxu0 0.0
    %1308 = vmatpush1.msra.mxu0 0.0
    %1309 = vmatprep.subr.mxu0 0.0
    %1310 = vmatpush1.msra.mxu0 0.0
    %1311 = vmatprep.subr.mxu0 0.0
    %1312 = vmatpush1.msra.mxu0 0.0
    %1313 = vmatprep.subr.mxu0 0.0
    %1314 = vmatpush1.msra.mxu0 0.0
    %1315 = vmatprep.subr.mxu0 0.0
    %1316 = vmatpush1.msra.mxu0 0.0
    %1317 = vmatprep.subr.mxu0 0.0
    %1318 = vmatpush1.msra.mxu0 0.0
    %1319 = vmatprep.subr.mxu0 0.0
    %1320 = vmatpush1.msra.mxu0 0.0
    %1321 = vmatprep.subr.mxu0 0.0
    %1322 = vmatpush1.msra.mxu0 0.0
    %1323 = vmatprep.subr.mxu0 0.0
    %1324 = vmatpush1.msra.mxu0 0.0
    %1325 = vmatprep.subr.mxu0 0.0
    %1326 = vmatpush1.msra.mxu0 0.0
    %1327 = vmatprep.subr.mxu0 0.0
    %1328 = vmatpush1.msra.mxu0 0.0
    %1329 = vmatprep.subr.mxu0 0.0
    %1330 = vmatpush1.msra.mxu0 0.0
    %1331 = vmatprep.mubr.f32.mxu0 0.0
    %1332 = vmatmul.mubr.f32.gmra.mrb[0].mxu0 %v1265
    %v1333 = vpop.f32.mrb[0].mxu0
    %v1334 = vadd.f32 0.0, %v1333
    %v1335 = vpop.f32.mrb[0].mxu0
    %1336 = vdwg.mxu0
    %1337 = vrot.lane.b32.xlu0 %v181, 64
    %v1338 = vpop.permute.xlu0 %1337
    %v1341 = vsel %vm186, %v879, 0
    %1343 = vmatprep.subr.mxu0 0.0
    %1344 = vmatpush1.msra.mxu0 %v1338
    %1345 = vmatprep.subr.mxu0 0.0
    %1346 = vmatpush1.msra.mxu0 0.0
    %1347 = vmatprep.subr.mxu0 0.0
    %1348 = vmatpush1.msra.mxu0 0.0
    %1349 = vmatprep.subr.mxu0 0.0
    %1350 = vmatpush1.msra.mxu0 0.0
    %1351 = vmatprep.subr.mxu0 0.0
    %1352 = vmatpush1.msra.mxu0 0.0
    %1353 = vmatprep.subr.mxu0 0.0
    %1354 = vmatpush1.msra.mxu0 0.0
    %1355 = vmatprep.subr.mxu0 0.0
    %1356 = vmatpush1.msra.mxu0 0.0
    %1357 = vmatprep.subr.mxu0 0.0
    %1358 = vmatpush1.msra.mxu0 0.0
    %1359 = vmatprep.subr.mxu0 0.0
    %1360 = vmatpush1.msra.mxu0 0.0
    %1361 = vmatprep.subr.mxu0 0.0
    %1362 = vmatpush1.msra.mxu0 0.0
    %1363 = vmatprep.subr.mxu0 0.0
    %1364 = vmatpush1.msra.mxu0 0.0
    %1365 = vmatprep.subr.mxu0 0.0
    %1366 = vmatpush1.msra.mxu0 0.0
    %1367 = vmatprep.subr.mxu0 0.0
    %1368 = vmatpush1.msra.mxu0 0.0
    %1369 = vmatprep.subr.mxu0 0.0
    %1370 = vmatpush1.msra.mxu0 0.0
    %1371 = vmatprep.subr.mxu0 0.0
    %1372 = vmatpush1.msra.mxu0 0.0
    %1373 = vmatprep.subr.mxu0 0.0
    %1374 = vmatpush1.msra.mxu0 0.0
    %1375 = vmatprep.subr.mxu0 0.0
    %1376 = vmatpush1.msra.mxu0 0.0
    %1377 = vmatprep.subr.mxu0 0.0
    %1378 = vmatpush1.msra.mxu0 0.0
    %1379 = vmatprep.subr.mxu0 0.0
    %1380 = vmatpush1.msra.mxu0 0.0
    %1381 = vmatprep.subr.mxu0 0.0
    %1382 = vmatpush1.msra.mxu0 0.0
    %1383 = vmatprep.subr.mxu0 0.0
    %1384 = vmatpush1.msra.mxu0 0.0
    %1385 = vmatprep.subr.mxu0 0.0
    %1386 = vmatpush1.msra.mxu0 0.0
    %1387 = vmatprep.subr.mxu0 0.0
    %1388 = vmatpush1.msra.mxu0 0.0
    %1389 = vmatprep.subr.mxu0 0.0
    %1390 = vmatpush1.msra.mxu0 0.0
    %1391 = vmatprep.subr.mxu0 0.0
    %1392 = vmatpush1.msra.mxu0 0.0
    %1393 = vmatprep.subr.mxu0 0.0
    %1394 = vmatpush1.msra.mxu0 0.0
    %1395 = vmatprep.subr.mxu0 0.0
    %1396 = vmatpush1.msra.mxu0 0.0
    %1397 = vmatprep.subr.mxu0 0.0
    %1398 = vmatpush1.msra.mxu0 0.0
    %1399 = vmatprep.subr.mxu0 0.0
    %1400 = vmatpush1.msra.mxu0 0.0
    %1401 = vmatprep.subr.mxu0 0.0
    %1402 = vmatpush1.msra.mxu0 0.0
    %1403 = vmatprep.subr.mxu0 0.0
    %1404 = vmatpush1.msra.mxu0 0.0
    %1405 = vmatprep.subr.mxu0 0.0
    %1406 = vmatpush1.msra.mxu0 0.0
    %1407 = vmatprep.mubr.f32.mxu0 0.0
    %1408 = vmatmul.mubr.f32.gmra.mrb[0].mxu0 %v1341
    %v1409 = vpop.f32.mrb[0].mxu0
    %v1410 = vadd.f32 0.0, %v1409
    %v1411 = vpop.f32.mrb[0].mxu0
    %1412 = vdwg.mxu0
    %1413 = vrot.lane.b32.xlu0 %v183, 64
    %v1414 = vpop.permute.xlu0 %1413
    %v1417 = vsel %vm186, %v880, 0
    %1419 = vmatprep.subr.mxu0 0.0
    %1420 = vmatpush1.msra.mxu0 %v1414
    %1421 = vmatprep.subr.mxu0 0.0
    %1422 = vmatpush1.msra.mxu0 0.0
    %1423 = vmatprep.subr.mxu0 0.0
    %1424 = vmatpush1.msra.mxu0 0.0
    %1425 = vmatprep.subr.mxu0 0.0
    %1426 = vmatpush1.msra.mxu0 0.0
    %1427 = vmatprep.subr.mxu0 0.0
    %1428 = vmatpush1.msra.mxu0 0.0
    %1429 = vmatprep.subr.mxu0 0.0
    %1430 = vmatpush1.msra.mxu0 0.0
    %1431 = vmatprep.subr.mxu0 0.0
    %1432 = vmatpush1.msra.mxu0 0.0
    %1433 = vmatprep.subr.mxu0 0.0
    %1434 = vmatpush1.msra.mxu0 0.0
    %1435 = vmatprep.subr.mxu0 0.0
    %1436 = vmatpush1.msra.mxu0 0.0
    %1437 = vmatprep.subr.mxu0 0.0
    %1438 = vmatpush1.msra.mxu0 0.0
    %1439 = vmatprep.subr.mxu0 0.0
    %1440 = vmatpush1.msra.mxu0 0.0
    %1441 = vmatprep.subr.mxu0 0.0
    %1442 = vmatpush1.msra.mxu0 0.0
    %1443 = vmatprep.subr.mxu0 0.0
    %1444 = vmatpush1.msra.mxu0 0.0
    %1445 = vmatprep.subr.mxu0 0.0
    %1446 = vmatpush1.msra.mxu0 0.0
    %1447 = vmatprep.subr.mxu0 0.0
    %1448 = vmatpush1.msra.mxu0 0.0
    %1449 = vmatprep.subr.mxu0 0.0
    %1450 = vmatpush1.msra.mxu0 0.0
    %1451 = vmatprep.subr.mxu0 0.0
    %1452 = vmatpush1.msra.mxu0 0.0
    %1453 = vmatprep.subr.mxu0 0.0
    %1454 = vmatpush1.msra.mxu0 0.0
    %1455 = vmatprep.subr.mxu0 0.0
    %1456 = vmatpush1.msra.mxu0 0.0
    %1457 = vmatprep.subr.mxu0 0.0
    %1458 = vmatpush1.msra.mxu0 0.0
    %1459 = vmatprep.subr.mxu0 0.0
    %1460 = vmatpush1.msra.mxu0 0.0
    %1461 = vmatprep.subr.mxu0 0.0
    %1462 = vmatpush1.msra.mxu0 0.0
    %1463 = vmatprep.subr.mxu0 0.0
    %1464 = vmatpush1.msra.mxu0 0.0
    %1465 = vmatprep.subr.mxu0 0.0
    %1466 = vmatpush1.msra.mxu0 0.0
    %1467 = vmatprep.subr.mxu0 0.0
    %1468 = vmatpush1.msra.mxu0 0.0
    %1469 = vmatprep.subr.mxu0 0.0
    %1470 = vmatpush1.msra.mxu0 0.0
    %1471 = vmatprep.subr.mxu0 0.0
    %1472 = vmatpush1.msra.mxu0 0.0
    %1473 = vmatprep.subr.mxu0 0.0
    %1474 = vmatpush1.msra.mxu0 0.0
    %1475 = vmatprep.subr.mxu0 0.0
    %1476 = vmatpush1.msra.mxu0 0.0
    %1477 = vmatprep.subr.mxu0 0.0
    %1478 = vmatpush1.msra.mxu0 0.0
    %1479 = vmatprep.subr.mxu0 0.0
    %1480 = vmatpush1.msra.mxu0 0.0
    %1481 = vmatprep.subr.mxu0 0.0
    %1482 = vmatpush1.msra.mxu0 0.0
    %1483 = vmatprep.mubr.f32.mxu0 0.0
    %1484 = vmatmul.mubr.f32.gmra.mrb[0].mxu0 %v1417
    %v1485 = vpop.f32.mrb[0].mxu0
    %v1486 = vadd.f32 0.0, %v1485
    %v1487 = vpop.f32.mrb[0].mxu0
    %1488 = vdwg.mxu0
    %v1489 = vld [vmem:[%s3] sm:$0xff]
    %v1490 = vld [vmem:[%s3 + $0x8] sm:$0xff]
    %v1491 = vld [vmem:[%s3 + $0x10] sm:$0xff]
    %v1492 = vld [vmem:[%s3 + $0x18] sm:$0xff]
    %v1494 = vsel %vm186, %v1030, 0
    %1496 = vmatprep.subr.mxu0 0.0
    %1497 = vmatpush1.msra.mxu0 %v1490
    %1498 = vmatprep.subr.mxu0 0.0
    %1499 = vmatpush1.msra.mxu0 0.0
    %1500 = vmatprep.subr.mxu0 0.0
    %1501 = vmatpush1.msra.mxu0 0.0
    %1502 = vmatprep.subr.mxu0 0.0
    %1503 = vmatpush1.msra.mxu0 0.0
    %1504 = vmatprep.subr.mxu0 0.0
    %1505 = vmatpush1.msra.mxu0 0.0
    %1506 = vmatprep.subr.mxu0 0.0
    %1507 = vmatpush1.msra.mxu0 0.0
    %1508 = vmatprep.subr.mxu0 0.0
    %1509 = vmatpush1.msra.mxu0 0.0
    %1510 = vmatprep.subr.mxu0 0.0
    %1511 = vmatpush1.msra.mxu0 0.0
    %1512 = vmatprep.subr.mxu0 0.0
    %1513 = vmatpush1.msra.mxu0 0.0
    %1514 = vmatprep.subr.mxu0 0.0
    %1515 = vmatpush1.msra.mxu0 0.0
    %1516 = vmatprep.subr.mxu0 0.0
    %1517 = vmatpush1.msra.mxu0 0.0
    %1518 = vmatprep.subr.mxu0 0.0
    %1519 = vmatpush1.msra.mxu0 0.0
    %1520 = vmatprep.subr.mxu0 0.0
    %1521 = vmatpush1.msra.mxu0 0.0
    %1522 = vmatprep.subr.mxu0 0.0
    %1523 = vmatpush1.msra.mxu0 0.0
    %1524 = vmatprep.subr.mxu0 0.0
    %1525 = vmatpush1.msra.mxu0 0.0
    %1526 = vmatprep.subr.mxu0 0.0
    %1527 = vmatpush1.msra.mxu0 0.0
    %1528 = vmatprep.subr.mxu0 0.0
    %1529 = vmatpush1.msra.mxu0 0.0
    %1530 = vmatprep.subr.mxu0 0.0
    %1531 = vmatpush1.msra.mxu0 0.0
    %1532 = vmatprep.subr.mxu0 0.0
    %1533 = vmatpush1.msra.mxu0 0.0
    %1534 = vmatprep.subr.mxu0 0.0
    %1535 = vmatpush1.msra.mxu0 0.0
    %1536 = vmatprep.subr.mxu0 0.0
    %1537 = vmatpush1.msra.mxu0 0.0
    %1538 = vmatprep.subr.mxu0 0.0
    %1539 = vmatpush1.msra.mxu0 0.0
    %1540 = vmatprep.subr.mxu0 0.0
    %1541 = vmatpush1.msra.mxu0 0.0
    %1542 = vmatprep.subr.mxu0 0.0
    %1543 = vmatpush1.msra.mxu0 0.0
    %1544 = vmatprep.subr.mxu0 0.0
    %1545 = vmatpush1.msra.mxu0 0.0
    %1546 = vmatprep.subr.mxu0 0.0
    %1547 = vmatpush1.msra.mxu0 0.0
    %1548 = vmatprep.subr.mxu0 0.0
    %1549 = vmatpush1.msra.mxu0 0.0
    %1550 = vmatprep.subr.mxu0 0.0
    %1551 = vmatpush1.msra.mxu0 0.0
    %1552 = vmatprep.subr.mxu0 0.0
    %1553 = vmatpush1.msra.mxu0 0.0
    %1554 = vmatprep.subr.mxu0 0.0
    %1555 = vmatpush1.msra.mxu0 0.0
    %1556 = vmatprep.subr.mxu0 0.0
    %1557 = vmatpush1.msra.mxu0 0.0
    %1558 = vmatprep.subr.mxu0 0.0
    %1559 = vmatpush1.msra.mxu0 0.0
    %1560 = vmatprep.mubr.f32.mxu0 0.0
    %1561 = vmatmul.mubr.f32.gmra.mrb[0].mxu0 %v1494
    %v1562 = vpop.f32.mrb[0].mxu0
    %v1563 = vadd.f32 0.0, %v1562
    %v1564 = vpop.f32.mrb[0].mxu0
    %1565 = vdwg.mxu0
    %v1567 = vsel %vm186, %v954, 0
    %1569 = vmatprep.subr.mxu0 0.0
    %1570 = vmatpush1.msra.mxu0 %v1489
    %1571 = vmatprep.subr.mxu0 0.0
    %1572 = vmatpush1.msra.mxu0 0.0
    %1573 = vmatprep.subr.mxu0 0.0
    %1574 = vmatpush1.msra.mxu0 0.0
    %1575 = vmatprep.subr.mxu0 0.0
    %1576 = vmatpush1.msra.mxu0 0.0
    %1577 = vmatprep.subr.mxu0 0.0
    %1578 = vmatpush1.msra.mxu0 0.0
    %1579 = vmatprep.subr.mxu0 0.0
    %1580 = vmatpush1.msra.mxu0 0.0
    %1581 = vmatprep.subr.mxu0 0.0
    %1582 = vmatpush1.msra.mxu0 0.0
    %1583 = vmatprep.subr.mxu0 0.0
    %1584 = vmatpush1.msra.mxu0 0.0
    %1585 = vmatprep.subr.mxu0 0.0
    %1586 = vmatpush1.msra.mxu0 0.0
    %1587 = vmatprep.subr.mxu0 0.0
    %1588 = vmatpush1.msra.mxu0 0.0
    %1589 = vmatprep.subr.mxu0 0.0
    %1590 = vmatpush1.msra.mxu0 0.0
    %1591 = vmatprep.subr.mxu0 0.0
    %1592 = vmatpush1.msra.mxu0 0.0
    %1593 = vmatprep.subr.mxu0 0.0
    %1594 = vmatpush1.msra.mxu0 0.0
    %1595 = vmatprep.subr.mxu0 0.0
    %1596 = vmatpush1.msra.mxu0 0.0
    %1597 = vmatprep.subr.mxu0 0.0
    %1598 = vmatpush1.msra.mxu0 0.0
    %1599 = vmatprep.subr.mxu0 0.0
    %1600 = vmatpush1.msra.mxu0 0.0
    %1601 = vmatprep.subr.mxu0 0.0
    %1602 = vmatpush1.msra.mxu0 0.0
    %1603 = vmatprep.subr.mxu0 0.0
    %1604 = vmatpush1.msra.mxu0 0.0
    %1605 = vmatprep.subr.mxu0 0.0
    %1606 = vmatpush1.msra.mxu0 0.0
    %1607 = vmatprep.subr.mxu0 0.0
    %1608 = vmatpush1.msra.mxu0 0.0
    %1609 = vmatprep.subr.mxu0 0.0
    %1610 = vmatpush1.msra.mxu0 0.0
    %1611 = vmatprep.subr.mxu0 0.0
    %1612 = vmatpush1.msra.mxu0 0.0
    %1613 = vmatprep.subr.mxu0 0.0
    %1614 = vmatpush1.msra.mxu0 0.0
    %1615 = vmatprep.subr.mxu0 0.0
    %1616 = vmatpush1.msra.mxu0 0.0
    %1617 = vmatprep.subr.mxu0 0.0
    %1618 = vmatpush1.msra.mxu0 0.0
    %1619 = vmatprep.subr.mxu0 0.0
    %1620 = vmatpush1.msra.mxu0 0.0
    %1621 = vmatprep.subr.mxu0 0.0
    %1622 = vmatpush1.msra.mxu0 0.0
    %1623 = vmatprep.subr.mxu0 0.0
    %1624 = vmatpush1.msra.mxu0 0.0
    %1625 = vmatprep.subr.mxu0 0.0
    %1626 = vmatpush1.msra.mxu0 0.0
    %1627 = vmatprep.subr.mxu0 0.0
    %1628 = vmatpush1.msra.mxu0 0.0
    %1629 = vmatprep.subr.mxu0 0.0
    %1630 = vmatpush1.msra.mxu0 0.0
    %1631 = vmatprep.subr.mxu0 0.0
    %1632 = vmatpush1.msra.mxu0 0.0
    %1633 = vmatprep.mubr.f32.mxu0 0.0
    %1634 = vmatmul.mubr.f32.gmra.mrb[0].mxu0 %v1567
    %v1635 = vpop.f32.mrb[0].mxu0
    %v1636 = vadd.f32 %v1563, %v1635
    %v1637 = vpop.f32.mrb[0].mxu0
    %1638 = vdwg.mxu0
    %v1640 = vsel %vm186, %v1106, 0
    %1642 = vmatprep.subr.mxu0 0.0
    %1643 = vmatpush1.msra.mxu0 %v1491
    %1644 = vmatprep.subr.mxu0 0.0
    %1645 = vmatpush1.msra.mxu0 0.0
    %1646 = vmatprep.subr.mxu0 0.0
    %1647 = vmatpush1.msra.mxu0 0.0
    %1648 = vmatprep.subr.mxu0 0.0
    %1649 = vmatpush1.msra.mxu0 0.0
    %1650 = vmatprep.subr.mxu0 0.0
    %1651 = vmatpush1.msra.mxu0 0.0
    %1652 = vmatprep.subr.mxu0 0.0
    %1653 = vmatpush1.msra.mxu0 0.0
    %1654 = vmatprep.subr.mxu0 0.0
    %1655 = vmatpush1.msra.mxu0 0.0
    %1656 = vmatprep.subr.mxu0 0.0
    %1657 = vmatpush1.msra.mxu0 0.0
    %1658 = vmatprep.subr.mxu0 0.0
    %1659 = vmatpush1.msra.mxu0 0.0
    %1660 = vmatprep.subr.mxu0 0.0
    %1661 = vmatpush1.msra.mxu0 0.0
    %1662 = vmatprep.subr.mxu0 0.0
    %1663 = vmatpush1.msra.mxu0 0.0
    %1664 = vmatprep.subr.mxu0 0.0
    %1665 = vmatpush1.msra.mxu0 0.0
    %1666 = vmatprep.subr.mxu0 0.0
    %1667 = vmatpush1.msra.mxu0 0.0
    %1668 = vmatprep.subr.mxu0 0.0
    %1669 = vmatpush1.msra.mxu0 0.0
    %1670 = vmatprep.subr.mxu0 0.0
    %1671 = vmatpush1.msra.mxu0 0.0
    %1672 = vmatprep.subr.mxu0 0.0
    %1673 = vmatpush1.msra.mxu0 0.0
    %1674 = vmatprep.subr.mxu0 0.0
    %1675 = vmatpush1.msra.mxu0 0.0
    %1676 = vmatprep.subr.mxu0 0.0
    %1677 = vmatpush1.msra.mxu0 0.0
    %1678 = vmatprep.subr.mxu0 0.0
    %1679 = vmatpush1.msra.mxu0 0.0
    %1680 = vmatprep.subr.mxu0 0.0
    %1681 = vmatpush1.msra.mxu0 0.0
    %1682 = vmatprep.subr.mxu0 0.0
    %1683 = vmatpush1.msra.mxu0 0.0
    %1684 = vmatprep.subr.mxu0 0.0
    %1685 = vmatpush1.msra.mxu0 0.0
    %1686 = vmatprep.subr.mxu0 0.0
    %1687 = vmatpush1.msra.mxu0 0.0
    %1688 = vmatprep.subr.mxu0 0.0
    %1689 = vmatpush1.msra.mxu0 0.0
    %1690 = vmatprep.subr.mxu0 0.0
    %1691 = vmatpush1.msra.mxu0 0.0
    %1692 = vmatprep.subr.mxu0 0.0
    %1693 = vmatpush1.msra.mxu0 0.0
    %1694 = vmatprep.subr.mxu0 0.0
    %1695 = vmatpush1.msra.mxu0 0.0
    %1696 = vmatprep.subr.mxu0 0.0
    %1697 = vmatpush1.msra.mxu0 0.0
    %1698 = vmatprep.subr.mxu0 0.0
    %1699 = vmatpush1.msra.mxu0 0.0
    %1700 = vmatprep.subr.mxu0 0.0
    %1701 = vmatpush1.msra.mxu0 0.0
    %1702 = vmatprep.subr.mxu0 0.0
    %1703 = vmatpush1.msra.mxu0 0.0
    %1704 = vmatprep.subr.mxu0 0.0
    %1705 = vmatpush1.msra.mxu0 0.0
    %1706 = vmatprep.mubr.f32.mxu0 0.0
    %1707 = vmatmul.mubr.f32.gmra.mrb[0].mxu0 %v1640
    %v1708 = vpop.f32.mrb[0].mxu0
    %v1709 = vadd.f32 0.0, %v1708
    %v1710 = vpop.f32.mrb[0].mxu0
    %1711 = vdwg.mxu0
    %v1712 = vadd.f32 %v1636, %v1709
    %v1714 = vsel %vm186, %v1182, 0
    %1716 = vmatprep.subr.mxu0 0.0
    %1717 = vmatpush1.msra.mxu0 %v1492
    %1718 = vmatprep.subr.mxu0 0.0
    %1719 = vmatpush1.msra.mxu0 0.0
    %1720 = vmatprep.subr.mxu0 0.0
    %1721 = vmatpush1.msra.mxu0 0.0
    %1722 = vmatprep.subr.mxu0 0.0
    %1723 = vmatpush1.msra.mxu0 0.0
    %1724 = vmatprep.subr.mxu0 0.0
    %1725 = vmatpush1.msra.mxu0 0.0
    %1726 = vmatprep.subr.mxu0 0.0
    %1727 = vmatpush1.msra.mxu0 0.0
    %1728 = vmatprep.subr.mxu0 0.0
    %1729 = vmatpush1.msra.mxu0 0.0
    %1730 = vmatprep.subr.mxu0 0.0
    %1731 = vmatpush1.msra.mxu0 0.0
    %1732 = vmatprep.subr.mxu0 0.0
    %1733 = vmatpush1.msra.mxu0 0.0
    %1734 = vmatprep.subr.mxu0 0.0
    %1735 = vmatpush1.msra.mxu0 0.0
    %1736 = vmatprep.subr.mxu0 0.0
    %1737 = vmatpush1.msra.mxu0 0.0
    %1738 = vmatprep.subr.mxu0 0.0
    %1739 = vmatpush1.msra.mxu0 0.0
    %1740 = vmatprep.subr.mxu0 0.0
    %1741 = vmatpush1.msra.mxu0 0.0
    %1742 = vmatprep.subr.mxu0 0.0
    %1743 = vmatpush1.msra.mxu0 0.0
    %1744 = vmatprep.subr.mxu0 0.0
    %1745 = vmatpush1.msra.mxu0 0.0
    %1746 = vmatprep.subr.mxu0 0.0
    %1747 = vmatpush1.msra.mxu0 0.0
    %1748 = vmatprep.subr.mxu0 0.0
    %1749 = vmatpush1.msra.mxu0 0.0
    %1750 = vmatprep.subr.mxu0 0.0
    %1751 = vmatpush1.msra.mxu0 0.0
    %1752 = vmatprep.subr.mxu0 0.0
    %1753 = vmatpush1.msra.mxu0 0.0
    %1754 = vmatprep.subr.mxu0 0.0
    %1755 = vmatpush1.msra.mxu0 0.0
    %1756 = vmatprep.subr.mxu0 0.0
    %1757 = vmatpush1.msra.mxu0 0.0
    %1758 = vmatprep.subr.mxu0 0.0
    %1759 = vmatpush1.msra.mxu0 0.0
    %1760 = vmatprep.subr.mxu0 0.0
    %1761 = vmatpush1.msra.mxu0 0.0
    %1762 = vmatprep.subr.mxu0 0.0
    %1763 = vmatpush1.msra.mxu0 0.0
    %1764 = vmatprep.subr.mxu0 0.0
    %1765 = vmatpush1.msra.mxu0 0.0
    %1766 = vmatprep.subr.mxu0 0.0
    %1767 = vmatpush1.msra.mxu0 0.0
    %1768 = vmatprep.subr.mxu0 0.0
    %1769 = vmatpush1.msra.mxu0 0.0
    %1770 = vmatprep.subr.mxu0 0.0
    %1771 = vmatpush1.msra.mxu0 0.0
    %1772 = vmatprep.subr.mxu0 0.0
    %1773 = vmatpush1.msra.mxu0 0.0
    %1774 = vmatprep.subr.mxu0 0.0
    %1775 = vmatpush1.msra.mxu0 0.0
    %1776 = vmatprep.subr.mxu0 0.0
    %1777 = vmatpush1.msra.mxu0 0.0
    %1778 = vmatprep.subr.mxu0 0.0
    %1779 = vmatpush1.msra.mxu0 0.0
    %1780 = vmatprep.mubr.f32.mxu0 0.0
    %1781 = vmatmul.mubr.f32.gmra.mrb[0].mxu0 %v1714
    %v1782 = vpop.f32.mrb[0].mxu0
    %v1783 = vadd.f32 0.0, %v1782
    %v1784 = vpop.f32.mrb[0].mxu0
    %1785 = vdwg.mxu0
    %v1786 = vadd.f32 %v1712, %v1783
    %v1788 = vsel %vm186, %v1334, 0
    %1790 = vmatprep.subr.mxu0 0.0
    %1791 = vmatpush1.msra.mxu0 %v1490
    %1792 = vmatprep.subr.mxu0 0.0
    %1793 = vmatpush1.msra.mxu0 0.0
    %1794 = vmatprep.subr.mxu0 0.0
    %1795 = vmatpush1.msra.mxu0 0.0
    %1796 = vmatprep.subr.mxu0 0.0
    %1797 = vmatpush1.msra.mxu0 0.0
    %1798 = vmatprep.subr.mxu0 0.0
    %1799 = vmatpush1.msra.mxu0 0.0
    %1800 = vmatprep.subr.mxu0 0.0
    %1801 = vmatpush1.msra.mxu0 0.0
    %1802 = vmatprep.subr.mxu0 0.0
    %1803 = vmatpush1.msra.mxu0 0.0
    %1804 = vmatprep.subr.mxu0 0.0
    %1805 = vmatpush1.msra.mxu0 0.0
    %1806 = vmatprep.subr.mxu0 0.0
    %1807 = vmatpush1.msra.mxu0 0.0
    %1808 = vmatprep.subr.mxu0 0.0
    %1809 = vmatpush1.msra.mxu0 0.0
    %1810 = vmatprep.subr.mxu0 0.0
    %1811 = vmatpush1.msra.mxu0 0.0
    %1812 = vmatprep.subr.mxu0 0.0
    %1813 = vmatpush1.msra.mxu0 0.0
    %1814 = vmatprep.subr.mxu0 0.0
    %1815 = vmatpush1.msra.mxu0 0.0
    %1816 = vmatprep.subr.mxu0 0.0
    %1817 = vmatpush1.msra.mxu0 0.0
    %1818 = vmatprep.subr.mxu0 0.0
    %1819 = vmatpush1.msra.mxu0 0.0
    %1820 = vmatprep.subr.mxu0 0.0
    %1821 = vmatpush1.msra.mxu0 0.0
    %1822 = vmatprep.subr.mxu0 0.0
    %1823 = vmatpush1.msra.mxu0 0.0
    %1824 = vmatprep.subr.mxu0 0.0
    %1825 = vmatpush1.msra.mxu0 0.0
    %1826 = vmatprep.subr.mxu0 0.0
    %1827 = vmatpush1.msra.mxu0 0.0
    %1828 = vmatprep.subr.mxu0 0.0
    %1829 = vmatpush1.msra.mxu0 0.0
    %1830 = vmatprep.subr.mxu0 0.0
    %1831 = vmatpush1.msra.mxu0 0.0
    %1832 = vmatprep.subr.mxu0 0.0
    %1833 = vmatpush1.msra.mxu0 0.0
    %1834 = vmatprep.subr.mxu0 0.0
    %1835 = vmatpush1.msra.mxu0 0.0
    %1836 = vmatprep.subr.mxu0 0.0
    %1837 = vmatpush1.msra.mxu0 0.0
    %1838 = vmatprep.subr.mxu0 0.0
    %1839 = vmatpush1.msra.mxu0 0.0
    %1840 = vmatprep.subr.mxu0 0.0
    %1841 = vmatpush1.msra.mxu0 0.0
    %1842 = vmatprep.subr.mxu0 0.0
    %1843 = vmatpush1.msra.mxu0 0.0
    %1844 = vmatprep.subr.mxu0 0.0
    %1845 = vmatpush1.msra.mxu0 0.0
    %1846 = vmatprep.subr.mxu0 0.0
    %1847 = vmatpush1.msra.mxu0 0.0
    %1848 = vmatprep.subr.mxu0 0.0
    %1849 = vmatpush1.msra.mxu0 0.0
    %1850 = vmatprep.subr.mxu0 0.0
    %1851 = vmatpush1.msra.mxu0 0.0
    %1852 = vmatprep.subr.mxu0 0.0
    %1853 = vmatpush1.msra.mxu0 0.0
    %1854 = vmatprep.mubr.f32.mxu0 0.0
    %1855 = vmatmul.mubr.f32.gmra.mrb[0].mxu0 %v1788
    %v1856 = vpop.f32.mrb[0].mxu0
    %v1857 = vadd.f32 0.0, %v1856
    %v1858 = vpop.f32.mrb[0].mxu0
    %1859 = vdwg.mxu0
    %v1861 = vsel %vm186, %v1258, 0
    %1863 = vmatprep.subr.mxu0 0.0
    %1864 = vmatpush1.msra.mxu0 %v1489
    %1865 = vmatprep.subr.mxu0 0.0
    %1866 = vmatpush1.msra.mxu0 0.0
    %1867 = vmatprep.subr.mxu0 0.0
    %1868 = vmatpush1.msra.mxu0 0.0
    %1869 = vmatprep.subr.mxu0 0.0
    %1870 = vmatpush1.msra.mxu0 0.0
    %1871 = vmatprep.subr.mxu0 0.0
    %1872 = vmatpush1.msra.mxu0 0.0
    %1873 = vmatprep.subr.mxu0 0.0
    %1874 = vmatpush1.msra.mxu0 0.0
    %1875 = vmatprep.subr.mxu0 0.0
    %1876 = vmatpush1.msra.mxu0 0.0
    %1877 = vmatprep.subr.mxu0 0.0
    %1878 = vmatpush1.msra.mxu0 0.0
    %1879 = vmatprep.subr.mxu0 0.0
    %1880 = vmatpush1.msra.mxu0 0.0
    %1881 = vmatprep.subr.mxu0 0.0
    %1882 = vmatpush1.msra.mxu0 0.0
    %1883 = vmatprep.subr.mxu0 0.0
    %1884 = vmatpush1.msra.mxu0 0.0
    %1885 = vmatprep.subr.mxu0 0.0
    %1886 = vmatpush1.msra.mxu0 0.0
    %1887 = vmatprep.subr.mxu0 0.0
    %1888 = vmatpush1.msra.mxu0 0.0
    %1889 = vmatprep.subr.mxu0 0.0
    %1890 = vmatpush1.msra.mxu0 0.0
    %1891 = vmatprep.subr.mxu0 0.0
    %1892 = vmatpush1.msra.mxu0 0.0
    %1893 = vmatprep.subr.mxu0 0.0
    %1894 = vmatpush1.msra.mxu0 0.0
    %1895 = vmatprep.subr.mxu0 0.0
    %1896 = vmatpush1.msra.mxu0 0.0
    %1897 = vmatprep.subr.mxu0 0.0
    %1898 = vmatpush1.msra.mxu0 0.0
    %1899 = vmatprep.subr.mxu0 0.0
    %1900 = vmatpush1.msra.mxu0 0.0
    %1901 = vmatprep.subr.mxu0 0.0
    %1902 = vmatpush1.msra.mxu0 0.0
    %1903 = vmatprep.subr.mxu0 0.0
    %1904 = vmatpush1.msra.mxu0 0.0
    %1905 = vmatprep.subr.mxu0 0.0
    %1906 = vmatpush1.msra.mxu0 0.0
    %1907 = vmatprep.subr.mxu0 0.0
    %1908 = vmatpush1.msra.mxu0 0.0
    %1909 = vmatprep.subr.mxu0 0.0
    %1910 = vmatpush1.msra.mxu0 0.0
    %1911 = vmatprep.subr.mxu0 0.0
    %1912 = vmatpush1.msra.mxu0 0.0
    %1913 = vmatprep.subr.mxu0 0.0
    %1914 = vmatpush1.msra.mxu0 0.0
    %1915 = vmatprep.subr.mxu0 0.0
    %1916 = vmatpush1.msra.mxu0 0.0
    %1917 = vmatprep.subr.mxu0 0.0
    %1918 = vmatpush1.msra.mxu0 0.0
    %1919 = vmatprep.subr.mxu0 0.0
    %1920 = vmatpush1.msra.mxu0 0.0
    %1921 = vmatprep.subr.mxu0 0.0
    %1922 = vmatpush1.msra.mxu0 0.0
    %1923 = vmatprep.subr.mxu0 0.0
    %1924 = vmatpush1.msra.mxu0 0.0
    %1925 = vmatprep.subr.mxu0 0.0
    %1926 = vmatpush1.msra.mxu0 0.0
    %1927 = vmatprep.mubr.f32.mxu0 0.0
    %1928 = vmatmul.mubr.f32.gmra.mrb[0].mxu0 %v1861
    %v1929 = vpop.f32.mrb[0].mxu0
    %v1930 = vadd.f32 %v1857, %v1929
    %v1931 = vpop.f32.mrb[0].mxu0
    %1932 = vdwg.mxu0
    %v1934 = vsel %vm186, %v1410, 0
    %1936 = vmatprep.subr.mxu0 0.0
    %1937 = vmatpush1.msra.mxu0 %v1491
    %1938 = vmatprep.subr.mxu0 0.0
    %1939 = vmatpush1.msra.mxu0 0.0
    %1940 = vmatprep.subr.mxu0 0.0
    %1941 = vmatpush1.msra.mxu0 0.0
    %1942 = vmatprep.subr.mxu0 0.0
    %1943 = vmatpush1.msra.mxu0 0.0
    %1944 = vmatprep.subr.mxu0 0.0
    %1945 = vmatpush1.msra.mxu0 0.0
    %1946 = vmatprep.subr.mxu0 0.0
    %1947 = vmatpush1.msra.mxu0 0.0
    %1948 = vmatprep.subr.mxu0 0.0
    %1949 = vmatpush1.msra.mxu0 0.0
    %1950 = vmatprep.subr.mxu0 0.0
    %1951 = vmatpush1.msra.mxu0 0.0
    %1952 = vmatprep.subr.mxu0 0.0
    %1953 = vmatpush1.msra.mxu0 0.0
    %1954 = vmatprep.subr.mxu0 0.0
    %1955 = vmatpush1.msra.mxu0 0.0
    %1956 = vmatprep.subr.mxu0 0.0
    %1957 = vmatpush1.msra.mxu0 0.0
    %1958 = vmatprep.subr.mxu0 0.0
    %1959 = vmatpush1.msra.mxu0 0.0
    %1960 = vmatprep.subr.mxu0 0.0
    %1961 = vmatpush1.msra.mxu0 0.0
    %1962 = vmatprep.subr.mxu0 0.0
    %1963 = vmatpush1.msra.mxu0 0.0
    %1964 = vmatprep.subr.mxu0 0.0
    %1965 = vmatpush1.msra.mxu0 0.0
    %1966 = vmatprep.subr.mxu0 0.0
    %1967 = vmatpush1.msra.mxu0 0.0
    %1968 = vmatprep.subr.mxu0 0.0
    %1969 = vmatpush1.msra.mxu0 0.0
    %1970 = vmatprep.subr.mxu0 0.0
    %1971 = vmatpush1.msra.mxu0 0.0
    %1972 = vmatprep.subr.mxu0 0.0
    %1973 = vmatpush1.msra.mxu0 0.0
    %1974 = vmatprep.subr.mxu0 0.0
    %1975 = vmatpush1.msra.mxu0 0.0
    %1976 = vmatprep.subr.mxu0 0.0
    %1977 = vmatpush1.msra.mxu0 0.0
    %1978 = vmatprep.subr.mxu0 0.0
    %1979 = vmatpush1.msra.mxu0 0.0
    %1980 = vmatprep.subr.mxu0 0.0
    %1981 = vmatpush1.msra.mxu0 0.0
    %1982 = vmatprep.subr.mxu0 0.0
    %1983 = vmatpush1.msra.mxu0 0.0
    %1984 = vmatprep.subr.mxu0 0.0
    %1985 = vmatpush1.msra.mxu0 0.0
    %1986 = vmatprep.subr.mxu0 0.0
    %1987 = vmatpush1.msra.mxu0 0.0
    %1988 = vmatprep.subr.mxu0 0.0
    %1989 = vmatpush1.msra.mxu0 0.0
    %1990 = vmatprep.subr.mxu0 0.0
    %1991 = vmatpush1.msra.mxu0 0.0
    %1992 = vmatprep.subr.mxu0 0.0
    %1993 = vmatpush1.msra.mxu0 0.0
    %1994 = vmatprep.subr.mxu0 0.0
    %1995 = vmatpush1.msra.mxu0 0.0
    %1996 = vmatprep.subr.mxu0 0.0
    %1997 = vmatpush1.msra.mxu0 0.0
    %1998 = vmatprep.subr.mxu0 0.0
    %1999 = vmatpush1.msra.mxu0 0.0
    %2000 = vmatprep.mubr.f32.mxu0 0.0
    %2001 = vmatmul.mubr.f32.gmra.mrb[0].mxu0 %v1934
    %v2002 = vpop.f32.mrb[0].mxu0
    %v2003 = vadd.f32 0.0, %v2002
    %v2004 = vpop.f32.mrb[0].mxu0
    %2005 = vdwg.mxu0
    %v2006 = vadd.f32 %v1930, %v2003
    %v2008 = vsel %vm186, %v1486, 0
    %2010 = vmatprep.subr.mxu0 0.0
    %2011 = vmatpush1.msra.mxu0 %v1492
    %2012 = vmatprep.subr.mxu0 0.0
    %2013 = vmatpush1.msra.mxu0 0.0
    %2014 = vmatprep.subr.mxu0 0.0
    %2015 = vmatpush1.msra.mxu0 0.0
    %2016 = vmatprep.subr.mxu0 0.0
    %2017 = vmatpush1.msra.mxu0 0.0
    %2018 = vmatprep.subr.mxu0 0.0
    %2019 = vmatpush1.msra.mxu0 0.0
    %2020 = vmatprep.subr.mxu0 0.0
    %2021 = vmatpush1.msra.mxu0 0.0
    %2022 = vmatprep.subr.mxu0 0.0
    %2023 = vmatpush1.msra.mxu0 0.0
    %2024 = vmatprep.subr.mxu0 0.0
    %2025 = vmatpush1.msra.mxu0 0.0
    %2026 = vmatprep.subr.mxu0 0.0
    %2027 = vmatpush1.msra.mxu0 0.0
    %2028 = vmatprep.subr.mxu0 0.0
    %2029 = vmatpush1.msra.mxu0 0.0
    %2030 = vmatprep.subr.mxu0 0.0
    %2031 = vmatpush1.msra.mxu0 0.0
    %2032 = vmatprep.subr.mxu0 0.0
    %2033 = vmatpush1.msra.mxu0 0.0
    %2034 = vmatprep.subr.mxu0 0.0
    %2035 = vmatpush1.msra.mxu0 0.0
    %2036 = vmatprep.subr.mxu0 0.0
    %2037 = vmatpush1.msra.mxu0 0.0
    %2038 = vmatprep.subr.mxu0 0.0
    %2039 = vmatpush1.msra.mxu0 0.0
    %2040 = vmatprep.subr.mxu0 0.0
    %2041 = vmatpush1.msra.mxu0 0.0
    %2042 = vmatprep.subr.mxu0 0.0
    %2043 = vmatpush1.msra.mxu0 0.0
    %2044 = vmatprep.subr.mxu0 0.0
    %2045 = vmatpush1.msra.mxu0 0.0
    %2046 = vmatprep.subr.mxu0 0.0
    %2047 = vmatpush1.msra.mxu0 0.0
    %2048 = vmatprep.subr.mxu0 0.0
    %2049 = vmatpush1.msra.mxu0 0.0
    %2050 = vmatprep.subr.mxu0 0.0
    %2051 = vmatpush1.msra.mxu0 0.0
    %2052 = vmatprep.subr.mxu0 0.0
    %2053 = vmatpush1.msra.mxu0 0.0
    %2054 = vmatprep.subr.mxu0 0.0
    %2055 = vmatpush1.msra.mxu0 0.0
    %2056 = vmatprep.subr.mxu0 0.0
    %2057 = vmatpush1.msra.mxu0 0.0
    %2058 = vmatprep.subr.mxu0 0.0
    %2059 = vmatpush1.msra.mxu0 0.0
    %2060 = vmatprep.subr.mxu0 0.0
    %2061 = vmatpush1.msra.mxu0 0.0
    %2062 = vmatprep.subr.mxu0 0.0
    %2063 = vmatpush1.msra.mxu0 0.0
    %2064 = vmatprep.subr.mxu0 0.0
    %2065 = vmatpush1.msra.mxu0 0.0
    %2066 = vmatprep.subr.mxu0 0.0
    %2067 = vmatpush1.msra.mxu0 0.0
    %2068 = vmatprep.subr.mxu0 0.0
    %2069 = vmatpush1.msra.mxu0 0.0
    %2070 = vmatprep.subr.mxu0 0.0
    %2071 = vmatpush1.msra.mxu0 0.0
    %2072 = vmatprep.subr.mxu0 0.0
    %2073 = vmatpush1.msra.mxu0 0.0
    %2074 = vmatprep.mubr.f32.mxu0 0.0
    %2075 = vmatmul.mubr.f32.gmra.mrb[0].mxu0 %v2008
    %v2076 = vpop.f32.mrb[0].mxu0
    %v2077 = vadd.f32 0.0, %v2076
    %v2078 = vpop.f32.mrb[0].mxu0
    %2079 = vdwg.mxu0
    %v2080 = vadd.f32 %v2006, %v2077
    %v2081 = vld [vmem:[%s4] sm:$0x1]
    %v2083 = vlaneseq
    %v2084 = vshrl.u32 %v2083, 7
    %v2085 = vsub.s32 0, %v2084
    %v2086 = vrot.slane %v2081, %v2085
    %v2088 = vadd.f32 %v1786, %v2086
    %v2089 = vadd.f32 %v2080, %v2086
    %v2090 = vadd.f32 %v59, %v2088
    %v2091 = vadd.f32 %v60, %v2089
    %v2092 = vld [vmem:[%s9] sm:$0x1]
    %v2093 = vld [vmem:[%s10] sm:$0x1]
    %v2094 = vsel %vm72, %v2090, 0.0
    %2095 = vadd.xlane.f32.xlu0 %v2094
    %v2096 = vpop.xlane.xlu0 %2095
    %v2097 = vsel %vm72, %v2091, 0.0
    %2098 = vadd.xlane.f32.xlu0 %v2097
    %v2099 = vpop.xlane.xlu0 %2098
    %v2100 = vrcp.pop 32.0
    %v2101 = vmul.f32 %v2096, %v2100
    %v2102 = vmul.f32 %v2099, %v2100
    %v2103 = vsub.f32 %v2090, %v2101
    %v2104 = vsub.f32 %v2091, %v2102
    %v2105 = vmul.f32 %v2103, %v2103
    %v2106 = vmul.f32 %v2104, %v2104
    %v2107 = vsel %vm72, %v2105, 0.0
    %2108 = vadd.xlane.f32.xlu0 %v2107
    %v2109 = vpop.xlane.xlu0 %2108
    %v2110 = vsel %vm72, %v2106, 0.0
    %2111 = vadd.xlane.f32.xlu0 %v2110
    %v2112 = vpop.xlane.xlu0 %2111
    %v2113 = vmul.f32 %v2109, %v2100
    %v2114 = vmul.f32 %v2112, %v2100
    %v2115 = vadd.f32 %v2113, 1e-05
    %v2116 = vadd.f32 %v2114, 1e-05
    %v2117 = vrsqrt.pop %v2115
    %v2118 = vrsqrt.pop %v2116
    %v2119 = vmul.f32 %v2103, %v2117
    %v2120 = vmul.f32 %v2104, %v2118
    %v2122 = vlaneseq
    %v2123 = vshrl.u32 %v2122, 7
    %v2124 = vsub.s32 0, %v2123
    %v2125 = vrot.slane %v2092, %v2124
    %v2127 = vmul.f32 %v2119, %v2125
    %v2128 = vmul.f32 %v2120, %v2125
    %v2130 = vlaneseq
    %v2131 = vshrl.u32 %v2130, 7
    %v2132 = vsub.s32 0, %v2131
    %v2133 = vrot.slane %v2093, %v2132
    %v2135 = vadd.f32 %v2127, %v2133
    %v2136 = vadd.f32 %v2128, %v2133
    %v2137 = vld [vmem:[%s5] sm:$0xff]
    %v2138 = vld [vmem:[%s5 + $0x8] sm:$0xff]
    %v2139 = vld [vmem:[%s5 + $0x10] sm:$0xff]
    %v2140 = vld [vmem:[%s5 + $0x18] sm:$0xff]
    %v2141 = vld [vmem:[%s6] sm:$0x1]
    %v2143 = vlaneseq
    %v2144 = vshrl.u32 %v2143, 7
    %v2145 = vsub.s32 0, %v2144
    %v2146 = vrot.slane %v2141, %v2145
    %v2149 = vsel %vm72, %v2135, 0
    %v2152 = vsel %vm72, %v2136, 0
    %2154 = vmatprep.subr.mxu0 0.0
    %2155 = vmatpush1.msra.mxu0 %v2137
    %2156 = vmatprep.subr.mxu0 0.0
    %2157 = vmatpush1.msra.mxu0 %v2138
    %2158 = vmatprep.subr.mxu0 0.0
    %2159 = vmatpush1.msra.mxu0 %v2139
    %2160 = vmatprep.subr.mxu0 0.0
    %2161 = vmatpush1.msra.mxu0 %v2140
    %2162 = vmatprep.subr.mxu0 0.0
    %2163 = vmatpush1.msra.mxu0 0.0
    %2164 = vmatprep.subr.mxu0 0.0
    %2165 = vmatpush1.msra.mxu0 0.0
    %2166 = vmatprep.subr.mxu0 0.0
    %2167 = vmatpush1.msra.mxu0 0.0
    %2168 = vmatprep.subr.mxu0 0.0
    %2169 = vmatpush1.msra.mxu0 0.0
    %2170 = vmatprep.subr.mxu0 0.0
    %2171 = vmatpush1.msra.mxu0 0.0
    %2172 = vmatprep.subr.mxu0 0.0
    %2173 = vmatpush1.msra.mxu0 0.0
    %2174 = vmatprep.subr.mxu0 0.0
    %2175 = vmatpush1.msra.mxu0 0.0
    %2176 = vmatprep.subr.mxu0 0.0
    %2177 = vmatpush1.msra.mxu0 0.0
    %2178 = vmatprep.subr.mxu0 0.0
    %2179 = vmatpush1.msra.mxu0 0.0
    %2180 = vmatprep.subr.mxu0 0.0
    %2181 = vmatpush1.msra.mxu0 0.0
    %2182 = vmatprep.subr.mxu0 0.0
    %2183 = vmatpush1.msra.mxu0 0.0
    %2184 = vmatprep.subr.mxu0 0.0
    %2185 = vmatpush1.msra.mxu0 0.0
    %2186 = vmatprep.subr.mxu0 0.0
    %2187 = vmatpush1.msra.mxu0 0.0
    %2188 = vmatprep.subr.mxu0 0.0
    %2189 = vmatpush1.msra.mxu0 0.0
    %2190 = vmatprep.subr.mxu0 0.0
    %2191 = vmatpush1.msra.mxu0 0.0
    %2192 = vmatprep.subr.mxu0 0.0
    %2193 = vmatpush1.msra.mxu0 0.0
    %2194 = vmatprep.subr.mxu0 0.0
    %2195 = vmatpush1.msra.mxu0 0.0
    %2196 = vmatprep.subr.mxu0 0.0
    %2197 = vmatpush1.msra.mxu0 0.0
    %2198 = vmatprep.subr.mxu0 0.0
    %2199 = vmatpush1.msra.mxu0 0.0
    %2200 = vmatprep.subr.mxu0 0.0
    %2201 = vmatpush1.msra.mxu0 0.0
    %2202 = vmatprep.subr.mxu0 0.0
    %2203 = vmatpush1.msra.mxu0 0.0
    %2204 = vmatprep.subr.mxu0 0.0
    %2205 = vmatpush1.msra.mxu0 0.0
    %2206 = vmatprep.subr.mxu0 0.0
    %2207 = vmatpush1.msra.mxu0 0.0
    %2208 = vmatprep.subr.mxu0 0.0
    %2209 = vmatpush1.msra.mxu0 0.0
    %2210 = vmatprep.subr.mxu0 0.0
    %2211 = vmatpush1.msra.mxu0 0.0
    %2212 = vmatprep.subr.mxu0 0.0
    %2213 = vmatpush1.msra.mxu0 0.0
    %2214 = vmatprep.subr.mxu0 0.0
    %2215 = vmatpush1.msra.mxu0 0.0
    %2216 = vmatprep.subr.mxu0 0.0
    %2217 = vmatpush1.msra.mxu0 0.0
    %2218 = vmatprep.mubr.f32.mxu0 0.0
    %2219 = vmatmul.mubr.f32.gmra.mrb[0].mxu0 %v2149
    %v2220 = vpop.f32.mrb[0].mxu0
    %v2221 = vadd.f32 %v2146, %v2220
    %v2222 = vpop.f32.mrb[0].mxu0
    %2223 = vmatprep.mubr.f32.mxu0 0.0
    %2224 = vmatmul.mubr.f32.gmra.mrb[0].mxu0 %v2152
    %v2225 = vpop.f32.mrb[0].mxu0
    %v2226 = vadd.f32 %v2146, %v2225
    %v2227 = vpop.f32.mrb[0].mxu0
    %2228 = vdwg.mxu0
    %v2229 = vmax.f32 %v2221, 0.0
    %v2230 = vmax.f32 %v2226, 0.0
    %v2231 = vld [vmem:[%s7] sm:$0xff]
    %v2232 = vld [vmem:[%s7 + $0x8] sm:$0xff]
    %v2233 = vld [vmem:[%s7 + $0x10] sm:$0xff]
    %v2234 = vld [vmem:[%s7 + $0x18] sm:$0xff]
    %v2235 = vld [vmem:[%s7 + $0x20] sm:$0xff]
    %v2236 = vld [vmem:[%s7 + $0x28] sm:$0xff]
    %v2237 = vld [vmem:[%s7 + $0x30] sm:$0xff]
    %v2238 = vld [vmem:[%s7 + $0x38] sm:$0xff]
    %v2239 = vld [vmem:[%s8] sm:$0x1]
    %v2241 = vlaneseq
    %v2242 = vshrl.u32 %v2241, 7
    %v2243 = vsub.s32 0, %v2242
    %v2244 = vrot.slane %v2239, %v2243
    %vm2246 = vcmask 523264
    %v2248 = vsel %vm2246, %v2229, 0
    %v2251 = vsel %vm2246, %v2230, 0
    %2253 = vmatprep.subr.mxu0 0.0
    %2254 = vmatpush1.msra.mxu0 %v2231
    %2255 = vmatprep.subr.mxu0 0.0
    %2256 = vmatpush1.msra.mxu0 %v2232
    %2257 = vmatprep.subr.mxu0 0.0
    %2258 = vmatpush1.msra.mxu0 %v2233
    %2259 = vmatprep.subr.mxu0 0.0
    %2260 = vmatpush1.msra.mxu0 %v2234
    %2261 = vmatprep.subr.mxu0 0.0
    %2262 = vmatpush1.msra.mxu0 %v2235
    %2263 = vmatprep.subr.mxu0 0.0
    %2264 = vmatpush1.msra.mxu0 %v2236
    %2265 = vmatprep.subr.mxu0 0.0
    %2266 = vmatpush1.msra.mxu0 %v2237
    %2267 = vmatprep.subr.mxu0 0.0
    %2268 = vmatpush1.msra.mxu0 %v2238
    %2269 = vmatprep.subr.mxu0 0.0
    %2270 = vmatpush1.msra.mxu0 0.0
    %2271 = vmatprep.subr.mxu0 0.0
    %2272 = vmatpush1.msra.mxu0 0.0
    %2273 = vmatprep.subr.mxu0 0.0
    %2274 = vmatpush1.msra.mxu0 0.0
    %2275 = vmatprep.subr.mxu0 0.0
    %2276 = vmatpush1.msra.mxu0 0.0
    %2277 = vmatprep.subr.mxu0 0.0
    %2278 = vmatpush1.msra.mxu0 0.0
    %2279 = vmatprep.subr.mxu0 0.0
    %2280 = vmatpush1.msra.mxu0 0.0
    %2281 = vmatprep.subr.mxu0 0.0
    %2282 = vmatpush1.msra.mxu0 0.0
    %2283 = vmatprep.subr.mxu0 0.0
    %2284 = vmatpush1.msra.mxu0 0.0
    %2285 = vmatprep.subr.mxu0 0.0
    %2286 = vmatpush1.msra.mxu0 0.0
    %2287 = vmatprep.subr.mxu0 0.0
    %2288 = vmatpush1.msra.mxu0 0.0
    %2289 = vmatprep.subr.mxu0 0.0
    %2290 = vmatpush1.msra.mxu0 0.0
    %2291 = vmatprep.subr.mxu0 0.0
    %2292 = vmatpush1.msra.mxu0 0.0
    %2293 = vmatprep.subr.mxu0 0.0
    %2294 = vmatpush1.msra.mxu0 0.0
    %2295 = vmatprep.subr.mxu0 0.0
    %2296 = vmatpush1.msra.mxu0 0.0
    %2297 = vmatprep.subr.mxu0 0.0
    %2298 = vmatpush1.msra.mxu0 0.0
    %2299 = vmatprep.subr.mxu0 0.0
    %2300 = vmatpush1.msra.mxu0 0.0
    %2301 = vmatprep.subr.mxu0 0.0
    %2302 = vmatpush1.msra.mxu0 0.0
    %2303 = vmatprep.subr.mxu0 0.0
    %2304 = vmatpush1.msra.mxu0 0.0
    %2305 = vmatprep.subr.mxu0 0.0
    %2306 = vmatpush1.msra.mxu0 0.0
    %2307 = vmatprep.subr.mxu0 0.0
    %2308 = vmatpush1.msra.mxu0 0.0
    %2309 = vmatprep.subr.mxu0 0.0
    %2310 = vmatpush1.msra.mxu0 0.0
    %2311 = vmatprep.subr.mxu0 0.0
    %2312 = vmatpush1.msra.mxu0 0.0
    %2313 = vmatprep.subr.mxu0 0.0
    %2314 = vmatpush1.msra.mxu0 0.0
    %2315 = vmatprep.subr.mxu0 0.0
    %2316 = vmatpush1.msra.mxu0 0.0
    %2317 = vmatprep.mubr.f32.mxu0 0.0
    %2318 = vmatmul.mubr.f32.gmra.mrb[0].mxu0 %v2248
    %v2319 = vpop.f32.mrb[0].mxu0
    %v2320 = vadd.f32 %v2244, %v2319
    %v2321 = vpop.f32.mrb[0].mxu0
    %2322 = vmatprep.mubr.f32.mxu0 0.0
    %2323 = vmatmul.mubr.f32.gmra.mrb[0].mxu0 %v2251
    %v2324 = vpop.f32.mrb[0].mxu0
    %v2325 = vadd.f32 %v2244, %v2324
    %v2326 = vpop.f32.mrb[0].mxu0
    %2327 = vdwg.mxu0
    %v2328 = vadd.f32 %v2135, %v2320
    %v2329 = vadd.f32 %v2136, %v2325
    %v2330 = vld [vmem:[%s11] sm:$0x1]
    %v2331 = vld [vmem:[%s12] sm:$0x1]
    %v2332 = vsel %vm72, %v2328, 0.0
    %2333 = vadd.xlane.f32.xlu0 %v2332
    %v2334 = vpop.xlane.xlu0 %2333
    %v2335 = vsel %vm72, %v2329, 0.0
    %2336 = vadd.xlane.f32.xlu0 %v2335
    %v2337 = vpop.xlane.xlu0 %2336
    %v2338 = vmul.f32 %v2334, %v2100
    %v2339 = vmul.f32 %v2337, %v2100
    %v2340 = vsub.f32 %v2328, %v2338
    %v2341 = vsub.f32 %v2329, %v2339
    %v2342 = vmul.f32 %v2340, %v2340
    %v2343 = vmul.f32 %v2341, %v2341
    %v2344 = vsel %vm72, %v2342, 0.0
    %2345 = vadd.xlane.f32.xlu0 %v2344
    %v2346 = vpop.xlane.xlu0 %2345
    %v2347 = vsel %vm72, %v2343, 0.0
    %2348 = vadd.xlane.f32.xlu0 %v2347
    %v2349 = vpop.xlane.xlu0 %2348
    %v2350 = vmul.f32 %v2346, %v2100
    %v2351 = vmul.f32 %v2349, %v2100
    %v2352 = vadd.f32 %v2350, 1e-05
    %v2353 = vadd.f32 %v2351, 1e-05
    %v2354 = vrsqrt.pop %v2352
    %v2355 = vrsqrt.pop %v2353
    %v2356 = vmul.f32 %v2340, %v2354
    %v2357 = vmul.f32 %v2341, %v2355
    %v2359 = vlaneseq
    %v2360 = vshrl.u32 %v2359, 7
    %v2361 = vsub.s32 0, %v2360
    %v2362 = vrot.slane %v2330, %v2361
    %v2364 = vmul.f32 %v2356, %v2362
    %v2365 = vmul.f32 %v2357, %v2362
    %v2367 = vlaneseq
    %v2368 = vshrl.u32 %v2367, 7
    %v2369 = vsub.s32 0, %v2368
    %v2370 = vrot.slane %v2331, %v2369
    %v2372 = vadd.f32 %v2364, %v2370
    %v2373 = vadd.f32 %v2365, %v2370
    %2374 = vst.msk [vmem:[#allocation5] sm:$0xff] %vm72, %v2372
    %2375 = vst.msk [vmem:[#allocation5 + $0x8] sm:$0xff] %vm72, %v2373
    // Predicated region
    $region58: #{tpu_custom_call.1} parent=1 // pred_check
      _
    $region59: #{tpu_custom_call.1} parent=1 // pred_check_branch
      %2377 = sbr.rel (0) target = $region61
    $region60: #{tpu_custom_call.1} parent=1 // pred_region
      %s2379 = ssub.s32 256, 256
      %2380 = vsyncadd [#allocation4], %s2379
      %s2381 = sshll.u32 [#allocation5], 4
      %s2382 = int_to_ptr.vmem [resolvable:$true] %s2381
      %2387 = dma.vmem_to_hbm [thread:$0]  %s2382, 256, %s13, [#allocation4], 128, 128, 8
    $region61: #{tpu_custom_call.1} parent=1 // pred_fallthru
      _
    // Predicated region
    $region62: #{tpu_custom_call.1} parent=1 // pred_check
      _
    $region63: #{tpu_custom_call.1} parent=1 // pred_check_branch
      %2389 = sbr.rel (0) target = $region65
    $region64: #{tpu_custom_call.1} parent=1 // pred_region
      %2390 = dma.done [#allocation4], 256
    $region65: #{tpu_custom_call.1} parent=1 // pred_fallthru
      _
    %2391 = vsyncpa [#allocation3], 1
    %2392 = vsyncpa [#allocation4], 1

</llo_original>
